<compile_context>
chip_gen: v7x
topology: tpu7x:2x2x1
jax: 0.10.0
libtpu: 0.0.40
codegen_flags: <defaults>
</compile_context>

<pallas_src>
import jax
import jax.numpy as jnp
from jax import lax
from jax.experimental import pallas as pl
from jax.experimental.pallas import tpu as pltpu


def _sigmoid(v):
    # single-EUP sigmoid: sigmoid(x) == 0.5 * tanh(0.5 * x) + 0.5   (no exp + divide)
    return 0.5 * jnp.tanh(0.5 * v) + 0.5


# -----------------------------------------------------------------------------
# One fused kernel: conv1d + sigmoid + (folded) avgpool + fused bi-LSTM + tanh +
# attention gate + GAP + classifier + sigmoid.
# -----------------------------------------------------------------------------
def _cnn_lstm_eca_kernel(
    x_ref,      # (Cin, BB*L) f32   input block: channel-major, batch folded into lanes
    cw_ref,     # (3, U, Cin) bf16  conv taps (k, out_ch, in_ch)
    cb_ref,     # (U, 1)      f32   conv bias
    wih_ref,    # (L, 8H)     bf16  [fwd | bwd] W_ih^T with AvgPool1d(2) folded in
    bz_ref,     # (1, 8H)     f32   [fwd | bwd] (b_ih + b_hh)
    whh_ref,    # (2H, 8H)    bf16  block-diag [[W_hh_f^T, 0], [0, W_hh_b^T]]
    aw_ref,     # (2H, 2H)    bf16  attn.weight^T
    ab_ref,     # (1, 2H)     f32   attn.bias
    clsr_ref,   # (T*BB, 256) bf16  cls.weight^T rows repeated BB times (lane padded)
    clsb_ref,   # (1, 256)    f32   cls.bias (lane padded)
    sel_ref,    # (BB, T*BB)  bf16  0/1 selection matrix: sel[b, t*BB + b] = 1
    o_ref,      # (BB, 256)   f32
):
    f32, bf16 = jnp.float32, jnp.bfloat16
    Cin, BBL = x_ref.shape
    U = cw_ref.shape[1]          # conv out-channels == lstm_units == seq length
    H = U
    T = U
    L = wih_ref.shape[0]         # un-pooled conv length (= 2 * U)
    BB = BBL // L                # batch samples in this grid block

    # ---------------- Conv1d(k=3, padding=1) + Sigmoid ------------------------
    # Taps are masked circular shifts along the lane axis; batch stays folded into
    # the matmul N dim so the MXU sees (U, Cin) @ (Cin, BB*L) (no broadcasts).
    x = x_ref[...]
    pos = lax.broadcasted_iota(jnp.int32, (Cin, BBL), 1) % L
    x_m1 = jnp.where(pos == 0, 0.0, jnp.roll(x, 1, axis=1))        # x[:, l-1]
    x_p1 = jnp.where(pos == L - 1, 0.0, jnp.roll(x, -1, axis=1))   # x[:, l+1]
    cw = cw_ref[...]
    conv = (jnp.dot(cw[0], x_m1.astype(bf16), preferred_element_type=f32)
            + jnp.dot(cw[1], x.astype(bf16), preferred_element_type=f32)
            + jnp.dot(cw[2], x_p1.astype(bf16), preferred_element_type=f32)
            + cb_ref[...])                                         # (U, BB*L)
    s = _sigmoid(conv)

    # relayout (U, BB*L) -> (BB*T, L): batch-major rows (T == U is the LSTM seq axis)
    s2 = jnp.concatenate([s[:, b * L:(b + 1) * L] for b in range(BB)], axis=0)

    # ---------------- AvgPool1d(2) + Dropout(eval) + LSTM input projection ----
    # Pooling (0.5 * row duplication) is folded into wih_ref.
    # TODO(synk): nn.Dropout(p=0.01) is treated as inference-mode identity.
    z = (jnp.dot(s2.astype(bf16), wih_ref[...], preferred_element_type=f32)
         + bz_ref[...]).reshape(BB, T, 8 * H)
    z_f = z[:, :, 0:4 * H]            # forward-direction gate pre-activations
    z_b = z[:, :, 4 * H:8 * H]        # backward-direction gate pre-activations

    # ---------------- fused bidirectional LSTM recurrence ---------------------
    # One block-diagonal (BB, 2H) @ (2H, 8H) matmul per step produces both
    # directions' recurrent contributions (forward uses t = st, backward t = T-1-st).
    whh = whh_ref[...]
    c_f = jnp.zeros((BB, H), f32)
    c_b = jnp.zeros((BB, H), f32)
    h_cat = jnp.zeros((BB, 2 * H), f32)
    hs_f = []
    hs_b = [None] * T

    def cell(pre, c):
        gif = _sigmoid(pre[:, 0:2 * H])          # input & forget gates (contiguous)
        gg = jnp.tanh(pre[:, 2 * H:3 * H])       # cell gate
        go = _sigmoid(pre[:, 3 * H:4 * H])       # output gate
        c = gif[:, H:2 * H] * c + gif[:, 0:H] * gg
        return go * jnp.tanh(c), c

    # TODO(synk): at real lstm_units (T >= 64) switch to lax.fori_loop + a VMEM
    # scratch for the per-step hidden states instead of a fully unrolled loop.
    for st in range(T):
        if st == 0:
            rec = jnp.zeros((BB, 8 * H), f32)    # h == 0 -> skip the first matmul
        else:
            rec = jnp.dot(h_cat.astype(bf16), whh, preferred_element_type=f32)
        h_f, c_f = cell(rec[:, 0:4 * H] + z_f[:, st, :], c_f)
        h_b, c_b = cell(rec[:, 4 * H:8 * H] + z_b[:, T - 1 - st, :], c_b)
        h_cat = jnp.concatenate([h_f, h_b], axis=1)
        hs_f.append(h_f)
        hs_b[T - 1 - st] = h_b                   # backward output belongs to time T-1-st

    # ---------------- Tanh -> attention gate -> GAP -> classifier -> Sigmoid --
    hf = jnp.concatenate(hs_f, axis=0)           # (T*BB, H), rows ordered r = t*BB + b
    hb = jnp.concatenate(hs_b, axis=0)           # (T*BB, H)
    y = jnp.tanh(jnp.concatenate([hf, hb], axis=1))                    # (T*BB, 2H)
    a = _sigmoid(jnp.dot(y.astype(bf16), aw_ref[...],
                         preferred_element_type=f32) + ab_ref[...])    # one attn matmul
    gap = jnp.sum(y * a, axis=1, keepdims=True) * (1.0 / (2 * H))      # (T*BB, 1)
    # logits[b, :] = sum_t gap[t*BB + b] * cls_w[t, :]  via ONE selection matmul
    head = (gap * clsr_ref[...]).astype(bf16)                          # (T*BB, 256)
    logits = jnp.dot(sel_ref[...], head, preferred_element_type=f32) + clsb_ref[...]
    o_ref[...] = _sigmoid(logits).astype(o_ref.dtype)


# -----------------------------------------------------------------------------
# Wrapper: weight re-layout / folding (tiny, outside the kernel) + pallas_call
# with a 1-D "parallel" batch grid.
# -----------------------------------------------------------------------------
def cnn_lstm_eca_forward(x, params, *, batch_block=None):
    """x: (B, dim, L) NCL with L == 2 * lstm_units (required by the module)."""
    B, Cin, L = x.shape
    U = params["conv_w"].shape[1]
    H = U
    T = U
    assert L == 2 * U, "AvgPool1d(2) output length must equal lstm_units"
    BB = B if batch_block is None else batch_block
    assert B % BB == 0
    # NOTE(scaling): for B > BB, BB*L must be a multiple of 128 (lane blocking of x)
    # and BB should be >= 8 / sublane-aligned for good vreg utilisation.
    f32, bf16 = jnp.float32, jnp.bfloat16

    # NCL -> (Cin, B*L): channel-major with the batch folded into lanes (layout plumbing)
    x2d = x.astype(f32).transpose(1, 0, 2).reshape(Cin, B * L)

    cw = params["conv_w"].astype(bf16)                     # (3, U, Cin)
    cb = params["conv_b"].reshape(U, 1).astype(f32)

    def fuse_pool(w_ih_t):                                 # (U, 4U) -> (L, 4U)
        return 0.5 * jnp.repeat(w_ih_t, 2, axis=0)         # AvgPool1d(2) folded in

    wih = jnp.concatenate([fuse_pool(params["w_ih_f"]),
                           fuse_pool(params["w_ih_b"])], axis=1).astype(bf16)   # (L, 8H)
    bz = jnp.concatenate([params["b_ih_f"] + params["b_hh_f"],
                          params["b_ih_b"] + params["b_hh_b"]]
                         ).reshape(1, 8 * H).astype(f32)
    zblk = jnp.zeros((H, 4 * H), f32)
    whh = jnp.concatenate(
        [jnp.concatenate([params["w_hh_f"], zblk], axis=1),
         jnp.concatenate([zblk, params["w_hh_b"]], axis=1)], axis=0).astype(bf16)  # (2H,8H)

    aw = params["attn_w"].astype(bf16)                     # (2H, 2H)
    ab = params["attn_b"].reshape(1, 2 * H).astype(f32)

    n_cls = params["cls_w"].shape[1]
    n_pad = ((n_cls + 127) // 128) * 128                   # lane-dense classifier width
    cls_w = jnp.zeros((T, n_pad), f32).at[:, :n_cls].set(params["cls_w"])
    clsr = jnp.repeat(cls_w, BB, axis=0).astype(bf16)      # (T*BB, n_pad)
    clsb = jnp.zeros((1, n_pad), f32).at[:, :n_cls].set(params["cls_b"].reshape(1, n_cls))
    sel = (jnp.arange(T * BB)[None, :] % BB
           == jnp.arange(BB)[:, None]).astype(bf16)        # (BB, T*BB)

    def _full_spec(arr):
        nd = arr.ndim
        return pl.BlockSpec(arr.shape, lambda i, _n=nd: (0,) * _n)

    out = pl.pallas_call(
        _cnn_lstm_eca_kernel,
        out_shape=jax.ShapeDtypeStruct((B, n_pad), f32),
        grid=(B // BB,),
        in_specs=[
            pl.BlockSpec((Cin, BB * L), lambda i: (0, i)),   # x: batch block along lanes
            _full_spec(cw), _full_spec(cb), _full_spec(wih), _full_spec(bz),
            _full_spec(whh), _full_spec(aw), _full_spec(ab),
            _full_spec(clsr), _full_spec(clsb), _full_spec(sel),
        ],
        out_specs=pl.BlockSpec((BB, n_pad), lambda i: (i, 0)),
        compiler_params=pltpu.CompilerParams(
            dimension_semantics=("parallel",),               # megacore batch sharding (v7x)
            vmem_limit_bytes=32 * 1024 * 1024,
        ),
    )(x2d, cw, cb, wih, bz, whh, aw, ab, clsr, clsb, sel)
    return out[:, :n_cls]


# -----------------------------------------------------------------------------
# Pure-JAX reference of the PyTorch forward (eval mode), for validation.
# -----------------------------------------------------------------------------
def reference_forward(x, params):
    B, _, L = x.shape
    U = params["conv_w"].shape[1]
    xp = jnp.pad(x, ((0, 0), (0, 0), (1, 1)))
    conv = sum(jnp.einsum("uc,bcl->bul", params["conv_w"][k], xp[:, :, k:k + L])
               for k in range(3)) + params["conv_b"][None, :, None]
    s = jax.nn.sigmoid(conv)
    pooled = 0.5 * (s[:, :, 0::2] + s[:, :, 1::2])              # (B, U, U)

    def run_dir(seq, w_ih_t, w_hh_t, b):
        Tn = seq.shape[1]
        h = jnp.zeros((B, U)); c = jnp.zeros((B, U)); hs = []
        for t in range(Tn):
            z = seq[:, t, :] @ w_ih_t + h @ w_hh_t + b
            i = jax.nn.sigmoid(z[:, :U]); f = jax.nn.sigmoid(z[:, U:2 * U])
            g = jnp.tanh(z[:, 2 * U:3 * U]); o = jax.nn.sigmoid(z[:, 3 * U:])
            c = f * c + i * g
            h = o * jnp.tanh(c)
            hs.append(h)
        return jnp.stack(hs, axis=1)

    b_f = params["b_ih_f"] + params["b_hh_f"]
    b_b = params["b_ih_b"] + params["b_hh_b"]
    out_f = run_dir(pooled, params["w_ih_f"], params["w_hh_f"], b_f)
    out_b = run_dir(pooled[:, ::-1, :], params["w_ih_b"], params["w_hh_b"], b_b)[:, ::-1, :]
    y = jnp.tanh(jnp.concatenate([out_f, out_b], axis=-1))      # (B, T, 2U)
    a = jax.nn.sigmoid(jnp.einsum("btk,kj->btj", y, params["attn_w"]) + params["attn_b"])
    gap = (y * a).mean(axis=-1)                                 # (B, T)
    return jax.nn.sigmoid(gap @ params["cls_w"] + params["cls_b"])


# -----------------------------------------------------------------------------
# Deterministic synthetic parameters (layouts already transposed for the kernel).
# -----------------------------------------------------------------------------
def init_params(key, dim, lstm_units, n_classes=200):
    U = lstm_units
    ks = jax.random.split(key, 14)
    sc = 0.1
    return {
        "conv_w": sc * jax.random.normal(ks[0], (3, U, dim), jnp.float32),
        "conv_b": sc * jax.random.normal(ks[1], (U,), jnp.float32),
        "w_ih_f": sc * jax.random.normal(ks[2], (U, 4 * U), jnp.float32),
        "w_hh_f": sc * jax.random.normal(ks[3], (U, 4 * U), jnp.float32),
        "b_ih_f": sc * jax.random.normal(ks[4], (4 * U,), jnp.float32),
        "b_hh_f": sc * jax.random.normal(ks[5], (4 * U,), jnp.float32),
        "w_ih_b": sc * jax.random.normal(ks[6], (U, 4 * U), jnp.float32),
        "w_hh_b": sc * jax.random.normal(ks[7], (U, 4 * U), jnp.float32),
        "b_ih_b": sc * jax.random.normal(ks[8], (4 * U,), jnp.float32),
        "b_hh_b": sc * jax.random.normal(ks[9], (4 * U,), jnp.float32),
        "attn_w": sc * jax.random.normal(ks[10], (2 * U, 2 * U), jnp.float32),
        "attn_b": sc * jax.random.normal(ks[11], (2 * U,), jnp.float32),
        "cls_w": sc * jax.random.normal(ks[12], (U, n_classes), jnp.float32),
        "cls_b": sc * jax.random.normal(ks[13], (n_classes,), jnp.float32),
    }


if __name__ == "__main__":
    key = jax.random.PRNGKey(0)
    pkey, xkey = jax.random.split(key)

    # Small instantiation of CNNLSTMModel_ECA(dim=16, lstm_units=8):
    # the module's LSTM requires the pooled length to equal lstm_units => L = 2*U.
    B, dim, U = 2, 16, 8
    L = 2 * U
    params = init_params(pkey, dim, U)
    x = jax.random.normal(xkey, (B, dim, L), jnp.float32)   # NCL, like PyTorch

    fwd = jax.jit(cnn_lstm_eca_forward)
    out = jax.block_until_ready(fwd(x, params))
    assert out.shape == (B, 200), out.shape
    assert bool(jnp.all(jnp.isfinite(out)))
    assert bool(jnp.all((out > 0.0) & (out < 1.0)))          # final sigmoid range

    ref = reference_forward(x, params)
    max_err = float(jnp.max(jnp.abs(out - ref)))
    # bf16 matmul inputs (f32 accumulation) => slightly looser tolerance than pure f32.
    assert max_err < 2e-2, f"kernel vs reference mismatch: max abs err {max_err}"

    print("KERNEL_OK")
</pallas_src>

<mosaic_0001>
module attributes {stable_mosaic.version = 11 : i64} {
  func.func @_cnn_lstm_eca_kernel(%arg0: i32, %arg1: memref<16x32xf32, #tpu.memory_space<vmem>>, %arg2: memref<3x8x16xbf16, #tpu.memory_space<vmem>>, %arg3: memref<8x1xf32, #tpu.memory_space<vmem>>, %arg4: memref<16x64xbf16, #tpu.memory_space<vmem>>, %arg5: memref<1x64xf32, #tpu.memory_space<vmem>>, %arg6: memref<16x64xbf16, #tpu.memory_space<vmem>>, %arg7: memref<16x16xbf16, #tpu.memory_space<vmem>>, %arg8: memref<1x16xf32, #tpu.memory_space<vmem>>, %arg9: memref<16x256xbf16, #tpu.memory_space<vmem>>, %arg10: memref<1x256xf32, #tpu.memory_space<vmem>>, %arg11: memref<2x16xbf16, #tpu.memory_space<vmem>>, %arg12: memref<2x256xf32, #tpu.memory_space<vmem>>) attributes {dimension_semantics = [#tpu.dimension_semantics<parallel>], iteration_bounds = array<i64: 1>, scalar_prefetch = 0 : i64, scratch_operands = 0 : i64, tpu.core_type = #tpu.core_type<tc>, window_params = [{transform_indices = @transform_0, window_bounds = array<i64: 16, 32>}, {pipeline_mode = #tpu.pipeline_mode<synchronous>, transform_indices = @transform_1, window_bounds = array<i64: 3, 8, 16>}, {pipeline_mode = #tpu.pipeline_mode<synchronous>, transform_indices = @transform_2, window_bounds = array<i64: 8, 1>}, {pipeline_mode = #tpu.pipeline_mode<synchronous>, transform_indices = @transform_3, window_bounds = array<i64: 16, 64>}, {pipeline_mode = #tpu.pipeline_mode<synchronous>, transform_indices = @transform_4, window_bounds = array<i64: 1, 64>}, {pipeline_mode = #tpu.pipeline_mode<synchronous>, transform_indices = @transform_5, window_bounds = array<i64: 16, 64>}, {pipeline_mode = #tpu.pipeline_mode<synchronous>, transform_indices = @transform_6, window_bounds = array<i64: 16, 16>}, {pipeline_mode = #tpu.pipeline_mode<synchronous>, transform_indices = @transform_7, window_bounds = array<i64: 1, 16>}, {pipeline_mode = #tpu.pipeline_mode<synchronous>, transform_indices = @transform_8, window_bounds = array<i64: 16, 256>}, {pipeline_mode = #tpu.pipeline_mode<synchronous>, transform_indices = @transform_9, window_bounds = array<i64: 1, 256>}, {pipeline_mode = #tpu.pipeline_mode<synchronous>, transform_indices = @transform_10, window_bounds = array<i64: 2, 16>}, {transform_indices = @transform_11, window_bounds = array<i64: 2, 256>}]} {
    %c0 = arith.constant 0 : index
    %c0_0 = arith.constant 0 : index
    %0 = vector.load %arg1[%c0, %c0_0] : memref<16x32xf32, #tpu.memory_space<vmem>>, vector<16x32xf32>
    %1 = tpu.iota {dimensions = array<i32: 1>} : vector<16x32xi32>
    %c16_i32 = arith.constant 16 : i32
    %c0_i32 = arith.constant 0 : i32
    %2 = arith.cmpi eq, %c16_i32, %c0_i32 : i32
    %c1_i32 = arith.constant 1 : i32
    %3 = arith.select %2, %c1_i32, %c16_i32 : i32
    %4 = vector.broadcast %3 : i32 to vector<16x32xi32>
    %5 = arith.remsi %1, %4 : vector<16x32xi32>
    %c0_i32_1 = arith.constant 0 : i32
    %6 = vector.broadcast %c0_i32_1 : i32 to vector<16x32xi32>
    %7 = arith.cmpi ne, %5, %6 : vector<16x32xi32>
    %c0_i32_2 = arith.constant 0 : i32
    %8 = vector.broadcast %c0_i32_2 : i32 to vector<16x32xi32>
    %9 = arith.cmpi slt, %5, %8 : vector<16x32xi32>
    %c0_i32_3 = arith.constant 0 : i32
    %10 = arith.cmpi slt, %3, %c0_i32_3 : i32
    %11 = vector.broadcast %10 : i1 to vector<16x32xi1>
    %12 = vector.broadcast %11 : vector<16x32xi1> to vector<16x32xi1>
    %13 = arith.xori %9, %12 : vector<16x32xi1>
    %14 = arith.andi %13, %7 : vector<16x32xi1>
    %15 = vector.broadcast %3 : i32 to vector<16x32xi32>
    %16 = arith.addi %5, %15 : vector<16x32xi32>
    %17 = arith.select %14, %16, %5 : vector<16x32xi1>, vector<16x32xi32>
    %c0_i32_4 = arith.constant 0 : i32
    %18 = vector.broadcast %c0_i32_4 : i32 to vector<16x32xi32>
    %19 = arith.cmpi eq, %17, %18 : vector<16x32xi32>
    %20 = vector.extract_strided_slice %0 {offsets = [0, 31], sizes = [16, 1], strides = [1, 1]} : vector<16x32xf32> to vector<16x1xf32>
    %21 = vector.extract_strided_slice %0 {offsets = [0, 0], sizes = [16, 31], strides = [1, 1]} : vector<16x32xf32> to vector<16x31xf32>
    %22 = tpu.concatenate %20, %21 in 1 : vector<16x1xf32>, vector<16x31xf32> -> vector<16x32xf32>
    %cst = arith.constant 0.000000e+00 : f32
    %23 = vector.broadcast %cst : f32 to vector<16x32xf32>
    %24 = arith.select %19, %23, %22 : vector<16x32xi1>, vector<16x32xf32>
    %c15_i32 = arith.constant 15 : i32
    %25 = vector.broadcast %c15_i32 : i32 to vector<16x32xi32>
    %26 = arith.cmpi eq, %17, %25 : vector<16x32xi32>
    %27 = vector.extract_strided_slice %0 {offsets = [0, 1], sizes = [16, 31], strides = [1, 1]} : vector<16x32xf32> to vector<16x31xf32>
    %28 = vector.extract_strided_slice %0 {offsets = [0, 0], sizes = [16, 1], strides = [1, 1]} : vector<16x32xf32> to vector<16x1xf32>
    %29 = tpu.concatenate %27, %28 in 1 : vector<16x31xf32>, vector<16x1xf32> -> vector<16x32xf32>
    %cst_5 = arith.constant 0.000000e+00 : f32
    %30 = vector.broadcast %cst_5 : f32 to vector<16x32xf32>
    %31 = arith.select %26, %30, %29 : vector<16x32xi1>, vector<16x32xf32>
    %c0_6 = arith.constant 0 : index
    %c0_7 = arith.constant 0 : index
    %c0_8 = arith.constant 0 : index
    %32 = vector.load %arg2[%c0_6, %c0_7, %c0_8] : memref<3x8x16xbf16, #tpu.memory_space<vmem>>, vector<3x8x16xbf16>
    %33 = vector.extract_strided_slice %32 {offsets = [0, 0, 0], sizes = [1, 8, 16], strides = [1, 1, 1]} : vector<3x8x16xbf16> to vector<1x8x16xbf16>
    %34 = vector.shape_cast %33 : vector<1x8x16xbf16> to vector<8x16xbf16>
    %35 = arith.truncf %24 : vector<16x32xf32> to vector<16x32xbf16>
    %cst_9 = arith.constant dense<0.000000e+00> : vector<8x32xf32>
    %36 = tpu.matmul %34, %35, %cst_9 {dimension_numbers = #tpu.dot_dimension_numbers<[1], [0], [0], [1], [0, 0, 1, 1], [], []>} : vector<8x16xbf16>, vector<16x32xbf16>, vector<8x32xf32> -> vector<8x32xf32>
    %37 = vector.extract_strided_slice %32 {offsets = [1, 0, 0], sizes = [1, 8, 16], strides = [1, 1, 1]} : vector<3x8x16xbf16> to vector<1x8x16xbf16>
    %38 = vector.shape_cast %37 : vector<1x8x16xbf16> to vector<8x16xbf16>
    %39 = arith.truncf %0 : vector<16x32xf32> to vector<16x32xbf16>
    %cst_10 = arith.constant dense<0.000000e+00> : vector<8x32xf32>
    %40 = tpu.matmul %38, %39, %cst_10 {dimension_numbers = #tpu.dot_dimension_numbers<[1], [0], [0], [1], [0, 0, 1, 1], [], []>} : vector<8x16xbf16>, vector<16x32xbf16>, vector<8x32xf32> -> vector<8x32xf32>
    %41 = arith.addf %36, %40 : vector<8x32xf32>
    %42 = vector.extract_strided_slice %32 {offsets = [2, 0, 0], sizes = [1, 8, 16], strides = [1, 1, 1]} : vector<3x8x16xbf16> to vector<1x8x16xbf16>
    %43 = vector.shape_cast %42 : vector<1x8x16xbf16> to vector<8x16xbf16>
    %44 = arith.truncf %31 : vector<16x32xf32> to vector<16x32xbf16>
    %cst_11 = arith.constant dense<0.000000e+00> : vector<8x32xf32>
    %45 = tpu.matmul %43, %44, %cst_11 {dimension_numbers = #tpu.dot_dimension_numbers<[1], [0], [0], [1], [0, 0, 1, 1], [], []>} : vector<8x16xbf16>, vector<16x32xbf16>, vector<8x32xf32> -> vector<8x32xf32>
    %46 = arith.addf %41, %45 : vector<8x32xf32>
    %c0_12 = arith.constant 0 : index
    %c0_13 = arith.constant 0 : index
    %47 = vector.load %arg3[%c0_12, %c0_13] : memref<8x1xf32, #tpu.memory_space<vmem>>, vector<8x1xf32>
    %48 = vector.broadcast %47 : vector<8x1xf32> to vector<8x32xf32>
    %49 = arith.addf %46, %48 : vector<8x32xf32>
    %cst_14 = arith.constant 5.000000e-01 : f32
    %50 = vector.broadcast %cst_14 : f32 to vector<8x32xf32>
    %51 = arith.mulf %50, %49 : vector<8x32xf32>
    %52 = math.tanh %51 : vector<8x32xf32>
    %cst_15 = arith.constant 5.000000e-01 : f32
    %53 = vector.broadcast %cst_15 : f32 to vector<8x32xf32>
    %54 = arith.mulf %53, %52 : vector<8x32xf32>
    %cst_16 = arith.constant 5.000000e-01 : f32
    %55 = vector.broadcast %cst_16 : f32 to vector<8x32xf32>
    %56 = arith.addf %54, %55 : vector<8x32xf32>
    %57 = vector.extract_strided_slice %56 {offsets = [0, 0], sizes = [8, 16], strides = [1, 1]} : vector<8x32xf32> to vector<8x16xf32>
    %58 = vector.extract_strided_slice %56 {offsets = [0, 16], sizes = [8, 16], strides = [1, 1]} : vector<8x32xf32> to vector<8x16xf32>
    %59 = tpu.concatenate %57, %58 in 0 : vector<8x16xf32>, vector<8x16xf32> -> vector<16x16xf32>
    %60 = arith.truncf %59 : vector<16x16xf32> to vector<16x16xbf16>
    %c0_17 = arith.constant 0 : index
    %c0_18 = arith.constant 0 : index
    %61 = vector.load %arg4[%c0_17, %c0_18] : memref<16x64xbf16, #tpu.memory_space<vmem>>, vector<16x64xbf16>
    %cst_19 = arith.constant dense<0.000000e+00> : vector<16x64xf32>
    %62 = tpu.matmul %60, %61, %cst_19 {dimension_numbers = #tpu.dot_dimension_numbers<[1], [0], [0], [1], [0, 0, 1, 1], [], []>} : vector<16x16xbf16>, vector<16x64xbf16>, vector<16x64xf32> -> vector<16x64xf32>
    %c0_20 = arith.constant 0 : index
    %c0_21 = arith.constant 0 : index
    %63 = vector.load %arg5[%c0_20, %c0_21] : memref<1x64xf32, #tpu.memory_space<vmem>>, vector<1x64xf32>
    %64 = vector.broadcast %63 : vector<1x64xf32> to vector<16x64xf32>
    %65 = arith.addf %62, %64 : vector<16x64xf32>
    %66 = vector.shape_cast %65 : vector<16x64xf32> to vector<2x8x64xf32>
    %67 = vector.extract_strided_slice %66 {offsets = [0, 0, 0], sizes = [2, 8, 32], strides = [1, 1, 1]} : vector<2x8x64xf32> to vector<2x8x32xf32>
    %68 = vector.extract_strided_slice %66 {offsets = [0, 0, 32], sizes = [2, 8, 32], strides = [1, 1, 1]} : vector<2x8x64xf32> to vector<2x8x32xf32>
    %c0_22 = arith.constant 0 : index
    %c0_23 = arith.constant 0 : index
    %69 = vector.load %arg6[%c0_22, %c0_23] : memref<16x64xbf16, #tpu.memory_space<vmem>>, vector<16x64xbf16>
    %cst_24 = arith.constant 0.000000e+00 : f32
    %70 = vector.broadcast %cst_24 : f32 to vector<2x8xf32>
    %cst_25 = arith.constant 0.000000e+00 : f32
    %71 = vector.broadcast %cst_25 : f32 to vector<2x8xf32>
    %cst_26 = arith.constant 0.000000e+00 : f32
    %72 = vector.broadcast %cst_26 : f32 to vector<2x64xf32>
    %73 = vector.extract_strided_slice %72 {offsets = [0, 0], sizes = [2, 32], strides = [1, 1]} : vector<2x64xf32> to vector<2x32xf32>
    %74 = vector.extract_strided_slice %67 {offsets = [0, 0, 0], sizes = [2, 1, 32], strides = [1, 1, 1]} : vector<2x8x32xf32> to vector<2x1x32xf32>
    %75 = vector.shape_cast %74 : vector<2x1x32xf32> to vector<2x32xf32>
    %76 = arith.addf %73, %75 : vector<2x32xf32>
    %77 = vector.extract_strided_slice %76 {offsets = [0, 0], sizes = [2, 16], strides = [1, 1]} : vector<2x32xf32> to vector<2x16xf32>
    %cst_27 = arith.constant 5.000000e-01 : f32
    %78 = vector.broadcast %cst_27 : f32 to vector<2x16xf32>
    %79 = arith.mulf %78, %77 : vector<2x16xf32>
    %80 = math.tanh %79 : vector<2x16xf32>
    %cst_28 = arith.constant 5.000000e-01 : f32
    %81 = vector.broadcast %cst_28 : f32 to vector<2x16xf32>
    %82 = arith.mulf %81, %80 : vector<2x16xf32>
    %cst_29 = arith.constant 5.000000e-01 : f32
    %83 = vector.broadcast %cst_29 : f32 to vector<2x16xf32>
    %84 = arith.addf %82, %83 : vector<2x16xf32>
    %85 = vector.extract_strided_slice %76 {offsets = [0, 16], sizes = [2, 8], strides = [1, 1]} : vector<2x32xf32> to vector<2x8xf32>
    %86 = math.tanh %85 : vector<2x8xf32>
    %87 = vector.extract_strided_slice %76 {offsets = [0, 24], sizes = [2, 8], strides = [1, 1]} : vector<2x32xf32> to vector<2x8xf32>
    %cst_30 = arith.constant 5.000000e-01 : f32
    %88 = vector.broadcast %cst_30 : f32 to vector<2x8xf32>
    %89 = arith.mulf %88, %87 : vector<2x8xf32>
    %90 = math.tanh %89 : vector<2x8xf32>
    %cst_31 = arith.constant 5.000000e-01 : f32
    %91 = vector.broadcast %cst_31 : f32 to vector<2x8xf32>
    %92 = arith.mulf %91, %90 : vector<2x8xf32>
    %cst_32 = arith.constant 5.000000e-01 : f32
    %93 = vector.broadcast %cst_32 : f32 to vector<2x8xf32>
    %94 = arith.addf %92, %93 : vector<2x8xf32>
    %95 = vector.extract_strided_slice %84 {offsets = [0, 8], sizes = [2, 8], strides = [1, 1]} : vector<2x16xf32> to vector<2x8xf32>
    %96 = arith.mulf %95, %70 : vector<2x8xf32>
    %97 = vector.extract_strided_slice %84 {offsets = [0, 0], sizes = [2, 8], strides = [1, 1]} : vector<2x16xf32> to vector<2x8xf32>
    %98 = arith.mulf %97, %86 : vector<2x8xf32>
    %99 = arith.addf %96, %98 : vector<2x8xf32>
    %100 = math.tanh %99 : vector<2x8xf32>
    %101 = arith.mulf %94, %100 : vector<2x8xf32>
    %102 = vector.extract_strided_slice %72 {offsets = [0, 32], sizes = [2, 32], strides = [1, 1]} : vector<2x64xf32> to vector<2x32xf32>
    %103 = vector.extract_strided_slice %68 {offsets = [0, 7, 0], sizes = [2, 1, 32], strides = [1, 1, 1]} : vector<2x8x32xf32> to vector<2x1x32xf32>
    %104 = vector.shape_cast %103 : vector<2x1x32xf32> to vector<2x32xf32>
    %105 = arith.addf %102, %104 : vector<2x32xf32>
    %106 = vector.extract_strided_slice %105 {offsets = [0, 0], sizes = [2, 16], strides = [1, 1]} : vector<2x32xf32> to vector<2x16xf32>
    %cst_33 = arith.constant 5.000000e-01 : f32
    %107 = vector.broadcast %cst_33 : f32 to vector<2x16xf32>
    %108 = arith.mulf %107, %106 : vector<2x16xf32>
    %109 = math.tanh %108 : vector<2x16xf32>
    %cst_34 = arith.constant 5.000000e-01 : f32
    %110 = vector.broadcast %cst_34 : f32 to vector<2x16xf32>
    %111 = arith.mulf %110, %109 : vector<2x16xf32>
    %cst_35 = arith.constant 5.000000e-01 : f32
    %112 = vector.broadcast %cst_35 : f32 to vector<2x16xf32>
    %113 = arith.addf %111, %112 : vector<2x16xf32>
    %114 = vector.extract_strided_slice %105 {offsets = [0, 16], sizes = [2, 8], strides = [1, 1]} : vector<2x32xf32> to vector<2x8xf32>
    %115 = math.tanh %114 : vector<2x8xf32>
    %116 = vector.extract_strided_slice %105 {offsets = [0, 24], sizes = [2, 8], strides = [1, 1]} : vector<2x32xf32> to vector<2x8xf32>
    %cst_36 = arith.constant 5.000000e-01 : f32
    %117 = vector.broadcast %cst_36 : f32 to vector<2x8xf32>
    %118 = arith.mulf %117, %116 : vector<2x8xf32>
    %119 = math.tanh %118 : vector<2x8xf32>
    %cst_37 = arith.constant 5.000000e-01 : f32
    %120 = vector.broadcast %cst_37 : f32 to vector<2x8xf32>
    %121 = arith.mulf %120, %119 : vector<2x8xf32>
    %cst_38 = arith.constant 5.000000e-01 : f32
    %122 = vector.broadcast %cst_38 : f32 to vector<2x8xf32>
    %123 = arith.addf %121, %122 : vector<2x8xf32>
    %124 = vector.extract_strided_slice %113 {offsets = [0, 8], sizes = [2, 8], strides = [1, 1]} : vector<2x16xf32> to vector<2x8xf32>
    %125 = arith.mulf %124, %71 : vector<2x8xf32>
    %126 = vector.extract_strided_slice %113 {offsets = [0, 0], sizes = [2, 8], strides = [1, 1]} : vector<2x16xf32> to vector<2x8xf32>
    %127 = arith.mulf %126, %115 : vector<2x8xf32>
    %128 = arith.addf %125, %127 : vector<2x8xf32>
    %129 = math.tanh %128 : vector<2x8xf32>
    %130 = arith.mulf %123, %129 : vector<2x8xf32>
    %131 = tpu.concatenate %101, %130 in 1 : vector<2x8xf32>, vector<2x8xf32> -> vector<2x16xf32>
    %132 = arith.truncf %131 : vector<2x16xf32> to vector<2x16xbf16>
    %cst_39 = arith.constant dense<0.000000e+00> : vector<2x64xf32>
    %133 = tpu.matmul %132, %69, %cst_39 {dimension_numbers = #tpu.dot_dimension_numbers<[1], [0], [0], [1], [0, 0, 1, 1], [], []>} : vector<2x16xbf16>, vector<16x64xbf16>, vector<2x64xf32> -> vector<2x64xf32>
    %134 = vector.extract_strided_slice %133 {offsets = [0, 0], sizes = [2, 32], strides = [1, 1]} : vector<2x64xf32> to vector<2x32xf32>
    %135 = vector.extract_strided_slice %67 {offsets = [0, 1, 0], sizes = [2, 1, 32], strides = [1, 1, 1]} : vector<2x8x32xf32> to vector<2x1x32xf32>
    %136 = vector.shape_cast %135 : vector<2x1x32xf32> to vector<2x32xf32>
    %137 = arith.addf %134, %136 : vector<2x32xf32>
    %138 = vector.extract_strided_slice %137 {offsets = [0, 0], sizes = [2, 16], strides = [1, 1]} : vector<2x32xf32> to vector<2x16xf32>
    %cst_40 = arith.constant 5.000000e-01 : f32
    %139 = vector.broadcast %cst_40 : f32 to vector<2x16xf32>
    %140 = arith.mulf %139, %138 : vector<2x16xf32>
    %141 = math.tanh %140 : vector<2x16xf32>
    %cst_41 = arith.constant 5.000000e-01 : f32
    %142 = vector.broadcast %cst_41 : f32 to vector<2x16xf32>
    %143 = arith.mulf %142, %141 : vector<2x16xf32>
    %cst_42 = arith.constant 5.000000e-01 : f32
    %144 = vector.broadcast %cst_42 : f32 to vector<2x16xf32>
    %145 = arith.addf %143, %144 : vector<2x16xf32>
    %146 = vector.extract_strided_slice %137 {offsets = [0, 16], sizes = [2, 8], strides = [1, 1]} : vector<2x32xf32> to vector<2x8xf32>
    %147 = math.tanh %146 : vector<2x8xf32>
    %148 = vector.extract_strided_slice %137 {offsets = [0, 24], sizes = [2, 8], strides = [1, 1]} : vector<2x32xf32> to vector<2x8xf32>
    %cst_43 = arith.constant 5.000000e-01 : f32
    %149 = vector.broadcast %cst_43 : f32 to vector<2x8xf32>
    %150 = arith.mulf %149, %148 : vector<2x8xf32>
    %151 = math.tanh %150 : vector<2x8xf32>
    %cst_44 = arith.constant 5.000000e-01 : f32
    %152 = vector.broadcast %cst_44 : f32 to vector<2x8xf32>
    %153 = arith.mulf %152, %151 : vector<2x8xf32>
    %cst_45 = arith.constant 5.000000e-01 : f32
    %154 = vector.broadcast %cst_45 : f32 to vector<2x8xf32>
    %155 = arith.addf %153, %154 : vector<2x8xf32>
    %156 = vector.extract_strided_slice %145 {offsets = [0, 8], sizes = [2, 8], strides = [1, 1]} : vector<2x16xf32> to vector<2x8xf32>
    %157 = arith.mulf %156, %99 : vector<2x8xf32>
    %158 = vector.extract_strided_slice %145 {offsets = [0, 0], sizes = [2, 8], strides = [1, 1]} : vector<2x16xf32> to vector<2x8xf32>
    %159 = arith.mulf %158, %147 : vector<2x8xf32>
    %160 = arith.addf %157, %159 : vector<2x8xf32>
    %161 = math.tanh %160 : vector<2x8xf32>
    %162 = arith.mulf %155, %161 : vector<2x8xf32>
    %163 = vector.extract_strided_slice %133 {offsets = [0, 32], sizes = [2, 32], strides = [1, 1]} : vector<2x64xf32> to vector<2x32xf32>
    %164 = vector.extract_strided_slice %68 {offsets = [0, 6, 0], sizes = [2, 1, 32], strides = [1, 1, 1]} : vector<2x8x32xf32> to vector<2x1x32xf32>
    %165 = vector.shape_cast %164 : vector<2x1x32xf32> to vector<2x32xf32>
    %166 = arith.addf %163, %165 : vector<2x32xf32>
    %167 = vector.extract_strided_slice %166 {offsets = [0, 0], sizes = [2, 16], strides = [1, 1]} : vector<2x32xf32> to vector<2x16xf32>
    %cst_46 = arith.constant 5.000000e-01 : f32
    %168 = vector.broadcast %cst_46 : f32 to vector<2x16xf32>
    %169 = arith.mulf %168, %167 : vector<2x16xf32>
    %170 = math.tanh %169 : vector<2x16xf32>
    %cst_47 = arith.constant 5.000000e-01 : f32
    %171 = vector.broadcast %cst_47 : f32 to vector<2x16xf32>
    %172 = arith.mulf %171, %170 : vector<2x16xf32>
    %cst_48 = arith.constant 5.000000e-01 : f32
    %173 = vector.broadcast %cst_48 : f32 to vector<2x16xf32>
    %174 = arith.addf %172, %173 : vector<2x16xf32>
    %175 = vector.extract_strided_slice %166 {offsets = [0, 16], sizes = [2, 8], strides = [1, 1]} : vector<2x32xf32> to vector<2x8xf32>
    %176 = math.tanh %175 : vector<2x8xf32>
    %177 = vector.extract_strided_slice %166 {offsets = [0, 24], sizes = [2, 8], strides = [1, 1]} : vector<2x32xf32> to vector<2x8xf32>
    %cst_49 = arith.constant 5.000000e-01 : f32
    %178 = vector.broadcast %cst_49 : f32 to vector<2x8xf32>
    %179 = arith.mulf %178, %177 : vector<2x8xf32>
    %180 = math.tanh %179 : vector<2x8xf32>
    %cst_50 = arith.constant 5.000000e-01 : f32
    %181 = vector.broadcast %cst_50 : f32 to vector<2x8xf32>
    %182 = arith.mulf %181, %180 : vector<2x8xf32>
    %cst_51 = arith.constant 5.000000e-01 : f32
    %183 = vector.broadcast %cst_51 : f32 to vector<2x8xf32>
    %184 = arith.addf %182, %183 : vector<2x8xf32>
    %185 = vector.extract_strided_slice %174 {offsets = [0, 8], sizes = [2, 8], strides = [1, 1]} : vector<2x16xf32> to vector<2x8xf32>
    %186 = arith.mulf %185, %128 : vector<2x8xf32>
    %187 = vector.extract_strided_slice %174 {offsets = [0, 0], sizes = [2, 8], strides = [1, 1]} : vector<2x16xf32> to vector<2x8xf32>
    %188 = arith.mulf %187, %176 : vector<2x8xf32>
    %189 = arith.addf %186, %188 : vector<2x8xf32>
    %190 = math.tanh %189 : vector<2x8xf32>
    %191 = arith.mulf %184, %190 : vector<2x8xf32>
    %192 = tpu.concatenate %162, %191 in 1 : vector<2x8xf32>, vector<2x8xf32> -> vector<2x16xf32>
    %193 = arith.truncf %192 : vector<2x16xf32> to vector<2x16xbf16>
    %cst_52 = arith.constant dense<0.000000e+00> : vector<2x64xf32>
    %194 = tpu.matmul %193, %69, %cst_52 {dimension_numbers = #tpu.dot_dimension_numbers<[1], [0], [0], [1], [0, 0, 1, 1], [], []>} : vector<2x16xbf16>, vector<16x64xbf16>, vector<2x64xf32> -> vector<2x64xf32>
    %195 = vector.extract_strided_slice %194 {offsets = [0, 0], sizes = [2, 32], strides = [1, 1]} : vector<2x64xf32> to vector<2x32xf32>
    %196 = vector.extract_strided_slice %67 {offsets = [0, 2, 0], sizes = [2, 1, 32], strides = [1, 1, 1]} : vector<2x8x32xf32> to vector<2x1x32xf32>
    %197 = vector.shape_cast %196 : vector<2x1x32xf32> to vector<2x32xf32>
    %198 = arith.addf %195, %197 : vector<2x32xf32>
    %199 = vector.extract_strided_slice %198 {offsets = [0, 0], sizes = [2, 16], strides = [1, 1]} : vector<2x32xf32> to vector<2x16xf32>
    %cst_53 = arith.constant 5.000000e-01 : f32
    %200 = vector.broadcast %cst_53 : f32 to vector<2x16xf32>
    %201 = arith.mulf %200, %199 : vector<2x16xf32>
    %202 = math.tanh %201 : vector<2x16xf32>
    %cst_54 = arith.constant 5.000000e-01 : f32
    %203 = vector.broadcast %cst_54 : f32 to vector<2x16xf32>
    %204 = arith.mulf %203, %202 : vector<2x16xf32>
    %cst_55 = arith.constant 5.000000e-01 : f32
    %205 = vector.broadcast %cst_55 : f32 to vector<2x16xf32>
    %206 = arith.addf %204, %205 : vector<2x16xf32>
    %207 = vector.extract_strided_slice %198 {offsets = [0, 16], sizes = [2, 8], strides = [1, 1]} : vector<2x32xf32> to vector<2x8xf32>
    %208 = math.tanh %207 : vector<2x8xf32>
    %209 = vector.extract_strided_slice %198 {offsets = [0, 24], sizes = [2, 8], strides = [1, 1]} : vector<2x32xf32> to vector<2x8xf32>
    %cst_56 = arith.constant 5.000000e-01 : f32
    %210 = vector.broadcast %cst_56 : f32 to vector<2x8xf32>
    %211 = arith.mulf %210, %209 : vector<2x8xf32>
    %212 = math.tanh %211 : vector<2x8xf32>
    %cst_57 = arith.constant 5.000000e-01 : f32
    %213 = vector.broadcast %cst_57 : f32 to vector<2x8xf32>
    %214 = arith.mulf %213, %212 : vector<2x8xf32>
    %cst_58 = arith.constant 5.000000e-01 : f32
    %215 = vector.broadcast %cst_58 : f32 to vector<2x8xf32>
    %216 = arith.addf %214, %215 : vector<2x8xf32>
    %217 = vector.extract_strided_slice %206 {offsets = [0, 8], sizes = [2, 8], strides = [1, 1]} : vector<2x16xf32> to vector<2x8xf32>
    %218 = arith.mulf %217, %160 : vector<2x8xf32>
    %219 = vector.extract_strided_slice %206 {offsets = [0, 0], sizes = [2, 8], strides = [1, 1]} : vector<2x16xf32> to vector<2x8xf32>
    %220 = arith.mulf %219, %208 : vector<2x8xf32>
    %221 = arith.addf %218, %220 : vector<2x8xf32>
    %222 = math.tanh %221 : vector<2x8xf32>
    %223 = arith.mulf %216, %222 : vector<2x8xf32>
    %224 = vector.extract_strided_slice %194 {offsets = [0, 32], sizes = [2, 32], strides = [1, 1]} : vector<2x64xf32> to vector<2x32xf32>
    %225 = vector.extract_strided_slice %68 {offsets = [0, 5, 0], sizes = [2, 1, 32], strides = [1, 1, 1]} : vector<2x8x32xf32> to vector<2x1x32xf32>
    %226 = vector.shape_cast %225 : vector<2x1x32xf32> to vector<2x32xf32>
    %227 = arith.addf %224, %226 : vector<2x32xf32>
    %228 = vector.extract_strided_slice %227 {offsets = [0, 0], sizes = [2, 16], strides = [1, 1]} : vector<2x32xf32> to vector<2x16xf32>
    %cst_59 = arith.constant 5.000000e-01 : f32
    %229 = vector.broadcast %cst_59 : f32 to vector<2x16xf32>
    %230 = arith.mulf %229, %228 : vector<2x16xf32>
    %231 = math.tanh %230 : vector<2x16xf32>
    %cst_60 = arith.constant 5.000000e-01 : f32
    %232 = vector.broadcast %cst_60 : f32 to vector<2x16xf32>
    %233 = arith.mulf %232, %231 : vector<2x16xf32>
    %cst_61 = arith.constant 5.000000e-01 : f32
    %234 = vector.broadcast %cst_61 : f32 to vector<2x16xf32>
    %235 = arith.addf %233, %234 : vector<2x16xf32>
    %236 = vector.extract_strided_slice %227 {offsets = [0, 16], sizes = [2, 8], strides = [1, 1]} : vector<2x32xf32> to vector<2x8xf32>
    %237 = math.tanh %236 : vector<2x8xf32>
    %238 = vector.extract_strided_slice %227 {offsets = [0, 24], sizes = [2, 8], strides = [1, 1]} : vector<2x32xf32> to vector<2x8xf32>
    %cst_62 = arith.constant 5.000000e-01 : f32
    %239 = vector.broadcast %cst_62 : f32 to vector<2x8xf32>
    %240 = arith.mulf %239, %238 : vector<2x8xf32>
    %241 = math.tanh %240 : vector<2x8xf32>
    %cst_63 = arith.constant 5.000000e-01 : f32
    %242 = vector.broadcast %cst_63 : f32 to vector<2x8xf32>
    %243 = arith.mulf %242, %241 : vector<2x8xf32>
    %cst_64 = arith.constant 5.000000e-01 : f32
    %244 = vector.broadcast %cst_64 : f32 to vector<2x8xf32>
    %245 = arith.addf %243, %244 : vector<2x8xf32>
    %246 = vector.extract_strided_slice %235 {offsets = [0, 8], sizes = [2, 8], strides = [1, 1]} : vector<2x16xf32> to vector<2x8xf32>
    %247 = arith.mulf %246, %189 : vector<2x8xf32>
    %248 = vector.extract_strided_slice %235 {offsets = [0, 0], sizes = [2, 8], strides = [1, 1]} : vector<2x16xf32> to vector<2x8xf32>
    %249 = arith.mulf %248, %237 : vector<2x8xf32>
    %250 = arith.addf %247, %249 : vector<2x8xf32>
    %251 = math.tanh %250 : vector<2x8xf32>
    %252 = arith.mulf %245, %251 : vector<2x8xf32>
    %253 = tpu.concatenate %223, %252 in 1 : vector<2x8xf32>, vector<2x8xf32> -> vector<2x16xf32>
    %254 = arith.truncf %253 : vector<2x16xf32> to vector<2x16xbf16>
    %cst_65 = arith.constant dense<0.000000e+00> : vector<2x64xf32>
    %255 = tpu.matmul %254, %69, %cst_65 {dimension_numbers = #tpu.dot_dimension_numbers<[1], [0], [0], [1], [0, 0, 1, 1], [], []>} : vector<2x16xbf16>, vector<16x64xbf16>, vector<2x64xf32> -> vector<2x64xf32>
    %256 = vector.extract_strided_slice %255 {offsets = [0, 0], sizes = [2, 32], strides = [1, 1]} : vector<2x64xf32> to vector<2x32xf32>
    %257 = vector.extract_strided_slice %67 {offsets = [0, 3, 0], sizes = [2, 1, 32], strides = [1, 1, 1]} : vector<2x8x32xf32> to vector<2x1x32xf32>
    %258 = vector.shape_cast %257 : vector<2x1x32xf32> to vector<2x32xf32>
    %259 = arith.addf %256, %258 : vector<2x32xf32>
    %260 = vector.extract_strided_slice %259 {offsets = [0, 0], sizes = [2, 16], strides = [1, 1]} : vector<2x32xf32> to vector<2x16xf32>
    %cst_66 = arith.constant 5.000000e-01 : f32
    %261 = vector.broadcast %cst_66 : f32 to vector<2x16xf32>
    %262 = arith.mulf %261, %260 : vector<2x16xf32>
    %263 = math.tanh %262 : vector<2x16xf32>
    %cst_67 = arith.constant 5.000000e-01 : f32
    %264 = vector.broadcast %cst_67 : f32 to vector<2x16xf32>
    %265 = arith.mulf %264, %263 : vector<2x16xf32>
    %cst_68 = arith.constant 5.000000e-01 : f32
    %266 = vector.broadcast %cst_68 : f32 to vector<2x16xf32>
    %267 = arith.addf %265, %266 : vector<2x16xf32>
    %268 = vector.extract_strided_slice %259 {offsets = [0, 16], sizes = [2, 8], strides = [1, 1]} : vector<2x32xf32> to vector<2x8xf32>
    %269 = math.tanh %268 : vector<2x8xf32>
    %270 = vector.extract_strided_slice %259 {offsets = [0, 24], sizes = [2, 8], strides = [1, 1]} : vector<2x32xf32> to vector<2x8xf32>
    %cst_69 = arith.constant 5.000000e-01 : f32
    %271 = vector.broadcast %cst_69 : f32 to vector<2x8xf32>
    %272 = arith.mulf %271, %270 : vector<2x8xf32>
    %273 = math.tanh %272 : vector<2x8xf32>
    %cst_70 = arith.constant 5.000000e-01 : f32
    %274 = vector.broadcast %cst_70 : f32 to vector<2x8xf32>
    %275 = arith.mulf %274, %273 : vector<2x8xf32>
    %cst_71 = arith.constant 5.000000e-01 : f32
    %276 = vector.broadcast %cst_71 : f32 to vector<2x8xf32>
    %277 = arith.addf %275, %276 : vector<2x8xf32>
    %278 = vector.extract_strided_slice %267 {offsets = [0, 8], sizes = [2, 8], strides = [1, 1]} : vector<2x16xf32> to vector<2x8xf32>
    %279 = arith.mulf %278, %221 : vector<2x8xf32>
    %280 = vector.extract_strided_slice %267 {offsets = [0, 0], sizes = [2, 8], strides = [1, 1]} : vector<2x16xf32> to vector<2x8xf32>
    %281 = arith.mulf %280, %269 : vector<2x8xf32>
    %282 = arith.addf %279, %281 : vector<2x8xf32>
    %283 = math.tanh %282 : vector<2x8xf32>
    %284 = arith.mulf %277, %283 : vector<2x8xf32>
    %285 = vector.extract_strided_slice %255 {offsets = [0, 32], sizes = [2, 32], strides = [1, 1]} : vector<2x64xf32> to vector<2x32xf32>
    %286 = vector.extract_strided_slice %68 {offsets = [0, 4, 0], sizes = [2, 1, 32], strides = [1, 1, 1]} : vector<2x8x32xf32> to vector<2x1x32xf32>
    %287 = vector.shape_cast %286 : vector<2x1x32xf32> to vector<2x32xf32>
    %288 = arith.addf %285, %287 : vector<2x32xf32>
    %289 = vector.extract_strided_slice %288 {offsets = [0, 0], sizes = [2, 16], strides = [1, 1]} : vector<2x32xf32> to vector<2x16xf32>
    %cst_72 = arith.constant 5.000000e-01 : f32
    %290 = vector.broadcast %cst_72 : f32 to vector<2x16xf32>
    %291 = arith.mulf %290, %289 : vector<2x16xf32>
    %292 = math.tanh %291 : vector<2x16xf32>
    %cst_73 = arith.constant 5.000000e-01 : f32
    %293 = vector.broadcast %cst_73 : f32 to vector<2x16xf32>
    %294 = arith.mulf %293, %292 : vector<2x16xf32>
    %cst_74 = arith.constant 5.000000e-01 : f32
    %295 = vector.broadcast %cst_74 : f32 to vector<2x16xf32>
    %296 = arith.addf %294, %295 : vector<2x16xf32>
    %297 = vector.extract_strided_slice %288 {offsets = [0, 16], sizes = [2, 8], strides = [1, 1]} : vector<2x32xf32> to vector<2x8xf32>
    %298 = math.tanh %297 : vector<2x8xf32>
    %299 = vector.extract_strided_slice %288 {offsets = [0, 24], sizes = [2, 8], strides = [1, 1]} : vector<2x32xf32> to vector<2x8xf32>
    %cst_75 = arith.constant 5.000000e-01 : f32
    %300 = vector.broadcast %cst_75 : f32 to vector<2x8xf32>
    %301 = arith.mulf %300, %299 : vector<2x8xf32>
    %302 = math.tanh %301 : vector<2x8xf32>
    %cst_76 = arith.constant 5.000000e-01 : f32
    %303 = vector.broadcast %cst_76 : f32 to vector<2x8xf32>
    %304 = arith.mulf %303, %302 : vector<2x8xf32>
    %cst_77 = arith.constant 5.000000e-01 : f32
    %305 = vector.broadcast %cst_77 : f32 to vector<2x8xf32>
    %306 = arith.addf %304, %305 : vector<2x8xf32>
    %307 = vector.extract_strided_slice %296 {offsets = [0, 8], sizes = [2, 8], strides = [1, 1]} : vector<2x16xf32> to vector<2x8xf32>
    %308 = arith.mulf %307, %250 : vector<2x8xf32>
    %309 = vector.extract_strided_slice %296 {offsets = [0, 0], sizes = [2, 8], strides = [1, 1]} : vector<2x16xf32> to vector<2x8xf32>
    %310 = arith.mulf %309, %298 : vector<2x8xf32>
    %311 = arith.addf %308, %310 : vector<2x8xf32>
    %312 = math.tanh %311 : vector<2x8xf32>
    %313 = arith.mulf %306, %312 : vector<2x8xf32>
    %314 = tpu.concatenate %284, %313 in 1 : vector<2x8xf32>, vector<2x8xf32> -> vector<2x16xf32>
    %315 = arith.truncf %314 : vector<2x16xf32> to vector<2x16xbf16>
    %cst_78 = arith.constant dense<0.000000e+00> : vector<2x64xf32>
    %316 = tpu.matmul %315, %69, %cst_78 {dimension_numbers = #tpu.dot_dimension_numbers<[1], [0], [0], [1], [0, 0, 1, 1], [], []>} : vector<2x16xbf16>, vector<16x64xbf16>, vector<2x64xf32> -> vector<2x64xf32>
    %317 = vector.extract_strided_slice %316 {offsets = [0, 0], sizes = [2, 32], strides = [1, 1]} : vector<2x64xf32> to vector<2x32xf32>
    %318 = vector.extract_strided_slice %67 {offsets = [0, 4, 0], sizes = [2, 1, 32], strides = [1, 1, 1]} : vector<2x8x32xf32> to vector<2x1x32xf32>
    %319 = vector.shape_cast %318 : vector<2x1x32xf32> to vector<2x32xf32>
    %320 = arith.addf %317, %319 : vector<2x32xf32>
    %321 = vector.extract_strided_slice %320 {offsets = [0, 0], sizes = [2, 16], strides = [1, 1]} : vector<2x32xf32> to vector<2x16xf32>
    %cst_79 = arith.constant 5.000000e-01 : f32
    %322 = vector.broadcast %cst_79 : f32 to vector<2x16xf32>
    %323 = arith.mulf %322, %321 : vector<2x16xf32>
    %324 = math.tanh %323 : vector<2x16xf32>
    %cst_80 = arith.constant 5.000000e-01 : f32
    %325 = vector.broadcast %cst_80 : f32 to vector<2x16xf32>
    %326 = arith.mulf %325, %324 : vector<2x16xf32>
    %cst_81 = arith.constant 5.000000e-01 : f32
    %327 = vector.broadcast %cst_81 : f32 to vector<2x16xf32>
    %328 = arith.addf %326, %327 : vector<2x16xf32>
    %329 = vector.extract_strided_slice %320 {offsets = [0, 16], sizes = [2, 8], strides = [1, 1]} : vector<2x32xf32> to vector<2x8xf32>
    %330 = math.tanh %329 : vector<2x8xf32>
    %331 = vector.extract_strided_slice %320 {offsets = [0, 24], sizes = [2, 8], strides = [1, 1]} : vector<2x32xf32> to vector<2x8xf32>
    %cst_82 = arith.constant 5.000000e-01 : f32
    %332 = vector.broadcast %cst_82 : f32 to vector<2x8xf32>
    %333 = arith.mulf %332, %331 : vector<2x8xf32>
    %334 = math.tanh %333 : vector<2x8xf32>
    %cst_83 = arith.constant 5.000000e-01 : f32
    %335 = vector.broadcast %cst_83 : f32 to vector<2x8xf32>
    %336 = arith.mulf %335, %334 : vector<2x8xf32>
    %cst_84 = arith.constant 5.000000e-01 : f32
    %337 = vector.broadcast %cst_84 : f32 to vector<2x8xf32>
    %338 = arith.addf %336, %337 : vector<2x8xf32>
    %339 = vector.extract_strided_slice %328 {offsets = [0, 8], sizes = [2, 8], strides = [1, 1]} : vector<2x16xf32> to vector<2x8xf32>
    %340 = arith.mulf %339, %282 : vector<2x8xf32>
    %341 = vector.extract_strided_slice %328 {offsets = [0, 0], sizes = [2, 8], strides = [1, 1]} : vector<2x16xf32> to vector<2x8xf32>
    %342 = arith.mulf %341, %330 : vector<2x8xf32>
    %343 = arith.addf %340, %342 : vector<2x8xf32>
    %344 = math.tanh %343 : vector<2x8xf32>
    %345 = arith.mulf %338, %344 : vector<2x8xf32>
    %346 = vector.extract_strided_slice %316 {offsets = [0, 32], sizes = [2, 32], strides = [1, 1]} : vector<2x64xf32> to vector<2x32xf32>
    %347 = vector.extract_strided_slice %68 {offsets = [0, 3, 0], sizes = [2, 1, 32], strides = [1, 1, 1]} : vector<2x8x32xf32> to vector<2x1x32xf32>
    %348 = vector.shape_cast %347 : vector<2x1x32xf32> to vector<2x32xf32>
    %349 = arith.addf %346, %348 : vector<2x32xf32>
    %350 = vector.extract_strided_slice %349 {offsets = [0, 0], sizes = [2, 16], strides = [1, 1]} : vector<2x32xf32> to vector<2x16xf32>
    %cst_85 = arith.constant 5.000000e-01 : f32
    %351 = vector.broadcast %cst_85 : f32 to vector<2x16xf32>
    %352 = arith.mulf %351, %350 : vector<2x16xf32>
    %353 = math.tanh %352 : vector<2x16xf32>
    %cst_86 = arith.constant 5.000000e-01 : f32
    %354 = vector.broadcast %cst_86 : f32 to vector<2x16xf32>
    %355 = arith.mulf %354, %353 : vector<2x16xf32>
    %cst_87 = arith.constant 5.000000e-01 : f32
    %356 = vector.broadcast %cst_87 : f32 to vector<2x16xf32>
    %357 = arith.addf %355, %356 : vector<2x16xf32>
    %358 = vector.extract_strided_slice %349 {offsets = [0, 16], sizes = [2, 8], strides = [1, 1]} : vector<2x32xf32> to vector<2x8xf32>
    %359 = math.tanh %358 : vector<2x8xf32>
    %360 = vector.extract_strided_slice %349 {offsets = [0, 24], sizes = [2, 8], strides = [1, 1]} : vector<2x32xf32> to vector<2x8xf32>
    %cst_88 = arith.constant 5.000000e-01 : f32
    %361 = vector.broadcast %cst_88 : f32 to vector<2x8xf32>
    %362 = arith.mulf %361, %360 : vector<2x8xf32>
    %363 = math.tanh %362 : vector<2x8xf32>
    %cst_89 = arith.constant 5.000000e-01 : f32
    %364 = vector.broadcast %cst_89 : f32 to vector<2x8xf32>
    %365 = arith.mulf %364, %363 : vector<2x8xf32>
    %cst_90 = arith.constant 5.000000e-01 : f32
    %366 = vector.broadcast %cst_90 : f32 to vector<2x8xf32>
    %367 = arith.addf %365, %366 : vector<2x8xf32>
    %368 = vector.extract_strided_slice %357 {offsets = [0, 8], sizes = [2, 8], strides = [1, 1]} : vector<2x16xf32> to vector<2x8xf32>
    %369 = arith.mulf %368, %311 : vector<2x8xf32>
    %370 = vector.extract_strided_slice %357 {offsets = [0, 0], sizes = [2, 8], strides = [1, 1]} : vector<2x16xf32> to vector<2x8xf32>
    %371 = arith.mulf %370, %359 : vector<2x8xf32>
    %372 = arith.addf %369, %371 : vector<2x8xf32>
    %373 = math.tanh %372 : vector<2x8xf32>
    %374 = arith.mulf %367, %373 : vector<2x8xf32>
    %375 = tpu.concatenate %345, %374 in 1 : vector<2x8xf32>, vector<2x8xf32> -> vector<2x16xf32>
    %376 = arith.truncf %375 : vector<2x16xf32> to vector<2x16xbf16>
    %cst_91 = arith.constant dense<0.000000e+00> : vector<2x64xf32>
    %377 = tpu.matmul %376, %69, %cst_91 {dimension_numbers = #tpu.dot_dimension_numbers<[1], [0], [0], [1], [0, 0, 1, 1], [], []>} : vector<2x16xbf16>, vector<16x64xbf16>, vector<2x64xf32> -> vector<2x64xf32>
    %378 = vector.extract_strided_slice %377 {offsets = [0, 0], sizes = [2, 32], strides = [1, 1]} : vector<2x64xf32> to vector<2x32xf32>
    %379 = vector.extract_strided_slice %67 {offsets = [0, 5, 0], sizes = [2, 1, 32], strides = [1, 1, 1]} : vector<2x8x32xf32> to vector<2x1x32xf32>
    %380 = vector.shape_cast %379 : vector<2x1x32xf32> to vector<2x32xf32>
    %381 = arith.addf %378, %380 : vector<2x32xf32>
    %382 = vector.extract_strided_slice %381 {offsets = [0, 0], sizes = [2, 16], strides = [1, 1]} : vector<2x32xf32> to vector<2x16xf32>
    %cst_92 = arith.constant 5.000000e-01 : f32
    %383 = vector.broadcast %cst_92 : f32 to vector<2x16xf32>
    %384 = arith.mulf %383, %382 : vector<2x16xf32>
    %385 = math.tanh %384 : vector<2x16xf32>
    %cst_93 = arith.constant 5.000000e-01 : f32
    %386 = vector.broadcast %cst_93 : f32 to vector<2x16xf32>
    %387 = arith.mulf %386, %385 : vector<2x16xf32>
    %cst_94 = arith.constant 5.000000e-01 : f32
    %388 = vector.broadcast %cst_94 : f32 to vector<2x16xf32>
    %389 = arith.addf %387, %388 : vector<2x16xf32>
    %390 = vector.extract_strided_slice %381 {offsets = [0, 16], sizes = [2, 8], strides = [1, 1]} : vector<2x32xf32> to vector<2x8xf32>
    %391 = math.tanh %390 : vector<2x8xf32>
    %392 = vector.extract_strided_slice %381 {offsets = [0, 24], sizes = [2, 8], strides = [1, 1]} : vector<2x32xf32> to vector<2x8xf32>
    %cst_95 = arith.constant 5.000000e-01 : f32
    %393 = vector.broadcast %cst_95 : f32 to vector<2x8xf32>
    %394 = arith.mulf %393, %392 : vector<2x8xf32>
    %395 = math.tanh %394 : vector<2x8xf32>
    %cst_96 = arith.constant 5.000000e-01 : f32
    %396 = vector.broadcast %cst_96 : f32 to vector<2x8xf32>
    %397 = arith.mulf %396, %395 : vector<2x8xf32>
    %cst_97 = arith.constant 5.000000e-01 : f32
    %398 = vector.broadcast %cst_97 : f32 to vector<2x8xf32>
    %399 = arith.addf %397, %398 : vector<2x8xf32>
    %400 = vector.extract_strided_slice %389 {offsets = [0, 8], sizes = [2, 8], strides = [1, 1]} : vector<2x16xf32> to vector<2x8xf32>
    %401 = arith.mulf %400, %343 : vector<2x8xf32>
    %402 = vector.extract_strided_slice %389 {offsets = [0, 0], sizes = [2, 8], strides = [1, 1]} : vector<2x16xf32> to vector<2x8xf32>
    %403 = arith.mulf %402, %391 : vector<2x8xf32>
    %404 = arith.addf %401, %403 : vector<2x8xf32>
    %405 = math.tanh %404 : vector<2x8xf32>
    %406 = arith.mulf %399, %405 : vector<2x8xf32>
    %407 = vector.extract_strided_slice %377 {offsets = [0, 32], sizes = [2, 32], strides = [1, 1]} : vector<2x64xf32> to vector<2x32xf32>
    %408 = vector.extract_strided_slice %68 {offsets = [0, 2, 0], sizes = [2, 1, 32], strides = [1, 1, 1]} : vector<2x8x32xf32> to vector<2x1x32xf32>
    %409 = vector.shape_cast %408 : vector<2x1x32xf32> to vector<2x32xf32>
    %410 = arith.addf %407, %409 : vector<2x32xf32>
    %411 = vector.extract_strided_slice %410 {offsets = [0, 0], sizes = [2, 16], strides = [1, 1]} : vector<2x32xf32> to vector<2x16xf32>
    %cst_98 = arith.constant 5.000000e-01 : f32
    %412 = vector.broadcast %cst_98 : f32 to vector<2x16xf32>
    %413 = arith.mulf %412, %411 : vector<2x16xf32>
    %414 = math.tanh %413 : vector<2x16xf32>
    %cst_99 = arith.constant 5.000000e-01 : f32
    %415 = vector.broadcast %cst_99 : f32 to vector<2x16xf32>
    %416 = arith.mulf %415, %414 : vector<2x16xf32>
    %cst_100 = arith.constant 5.000000e-01 : f32
    %417 = vector.broadcast %cst_100 : f32 to vector<2x16xf32>
    %418 = arith.addf %416, %417 : vector<2x16xf32>
    %419 = vector.extract_strided_slice %410 {offsets = [0, 16], sizes = [2, 8], strides = [1, 1]} : vector<2x32xf32> to vector<2x8xf32>
    %420 = math.tanh %419 : vector<2x8xf32>
    %421 = vector.extract_strided_slice %410 {offsets = [0, 24], sizes = [2, 8], strides = [1, 1]} : vector<2x32xf32> to vector<2x8xf32>
    %cst_101 = arith.constant 5.000000e-01 : f32
    %422 = vector.broadcast %cst_101 : f32 to vector<2x8xf32>
    %423 = arith.mulf %422, %421 : vector<2x8xf32>
    %424 = math.tanh %423 : vector<2x8xf32>
    %cst_102 = arith.constant 5.000000e-01 : f32
    %425 = vector.broadcast %cst_102 : f32 to vector<2x8xf32>
    %426 = arith.mulf %425, %424 : vector<2x8xf32>
    %cst_103 = arith.constant 5.000000e-01 : f32
    %427 = vector.broadcast %cst_103 : f32 to vector<2x8xf32>
    %428 = arith.addf %426, %427 : vector<2x8xf32>
    %429 = vector.extract_strided_slice %418 {offsets = [0, 8], sizes = [2, 8], strides = [1, 1]} : vector<2x16xf32> to vector<2x8xf32>
    %430 = arith.mulf %429, %372 : vector<2x8xf32>
    %431 = vector.extract_strided_slice %418 {offsets = [0, 0], sizes = [2, 8], strides = [1, 1]} : vector<2x16xf32> to vector<2x8xf32>
    %432 = arith.mulf %431, %420 : vector<2x8xf32>
    %433 = arith.addf %430, %432 : vector<2x8xf32>
    %434 = math.tanh %433 : vector<2x8xf32>
    %435 = arith.mulf %428, %434 : vector<2x8xf32>
    %436 = tpu.concatenate %406, %435 in 1 : vector<2x8xf32>, vector<2x8xf32> -> vector<2x16xf32>
    %437 = arith.truncf %436 : vector<2x16xf32> to vector<2x16xbf16>
    %cst_104 = arith.constant dense<0.000000e+00> : vector<2x64xf32>
    %438 = tpu.matmul %437, %69, %cst_104 {dimension_numbers = #tpu.dot_dimension_numbers<[1], [0], [0], [1], [0, 0, 1, 1], [], []>} : vector<2x16xbf16>, vector<16x64xbf16>, vector<2x64xf32> -> vector<2x64xf32>
    %439 = vector.extract_strided_slice %438 {offsets = [0, 0], sizes = [2, 32], strides = [1, 1]} : vector<2x64xf32> to vector<2x32xf32>
    %440 = vector.extract_strided_slice %67 {offsets = [0, 6, 0], sizes = [2, 1, 32], strides = [1, 1, 1]} : vector<2x8x32xf32> to vector<2x1x32xf32>
    %441 = vector.shape_cast %440 : vector<2x1x32xf32> to vector<2x32xf32>
    %442 = arith.addf %439, %441 : vector<2x32xf32>
    %443 = vector.extract_strided_slice %442 {offsets = [0, 0], sizes = [2, 16], strides = [1, 1]} : vector<2x32xf32> to vector<2x16xf32>
    %cst_105 = arith.constant 5.000000e-01 : f32
    %444 = vector.broadcast %cst_105 : f32 to vector<2x16xf32>
    %445 = arith.mulf %444, %443 : vector<2x16xf32>
    %446 = math.tanh %445 : vector<2x16xf32>
    %cst_106 = arith.constant 5.000000e-01 : f32
    %447 = vector.broadcast %cst_106 : f32 to vector<2x16xf32>
    %448 = arith.mulf %447, %446 : vector<2x16xf32>
    %cst_107 = arith.constant 5.000000e-01 : f32
    %449 = vector.broadcast %cst_107 : f32 to vector<2x16xf32>
    %450 = arith.addf %448, %449 : vector<2x16xf32>
    %451 = vector.extract_strided_slice %442 {offsets = [0, 16], sizes = [2, 8], strides = [1, 1]} : vector<2x32xf32> to vector<2x8xf32>
    %452 = math.tanh %451 : vector<2x8xf32>
    %453 = vector.extract_strided_slice %442 {offsets = [0, 24], sizes = [2, 8], strides = [1, 1]} : vector<2x32xf32> to vector<2x8xf32>
    %cst_108 = arith.constant 5.000000e-01 : f32
    %454 = vector.broadcast %cst_108 : f32 to vector<2x8xf32>
    %455 = arith.mulf %454, %453 : vector<2x8xf32>
    %456 = math.tanh %455 : vector<2x8xf32>
    %cst_109 = arith.constant 5.000000e-01 : f32
    %457 = vector.broadcast %cst_109 : f32 to vector<2x8xf32>
    %458 = arith.mulf %457, %456 : vector<2x8xf32>
    %cst_110 = arith.constant 5.000000e-01 : f32
    %459 = vector.broadcast %cst_110 : f32 to vector<2x8xf32>
    %460 = arith.addf %458, %459 : vector<2x8xf32>
    %461 = vector.extract_strided_slice %450 {offsets = [0, 8], sizes = [2, 8], strides = [1, 1]} : vector<2x16xf32> to vector<2x8xf32>
    %462 = arith.mulf %461, %404 : vector<2x8xf32>
    %463 = vector.extract_strided_slice %450 {offsets = [0, 0], sizes = [2, 8], strides = [1, 1]} : vector<2x16xf32> to vector<2x8xf32>
    %464 = arith.mulf %463, %452 : vector<2x8xf32>
    %465 = arith.addf %462, %464 : vector<2x8xf32>
    %466 = math.tanh %465 : vector<2x8xf32>
    %467 = arith.mulf %460, %466 : vector<2x8xf32>
    %468 = vector.extract_strided_slice %438 {offsets = [0, 32], sizes = [2, 32], strides = [1, 1]} : vector<2x64xf32> to vector<2x32xf32>
    %469 = vector.extract_strided_slice %68 {offsets = [0, 1, 0], sizes = [2, 1, 32], strides = [1, 1, 1]} : vector<2x8x32xf32> to vector<2x1x32xf32>
    %470 = vector.shape_cast %469 : vector<2x1x32xf32> to vector<2x32xf32>
    %471 = arith.addf %468, %470 : vector<2x32xf32>
    %472 = vector.extract_strided_slice %471 {offsets = [0, 0], sizes = [2, 16], strides = [1, 1]} : vector<2x32xf32> to vector<2x16xf32>
    %cst_111 = arith.constant 5.000000e-01 : f32
    %473 = vector.broadcast %cst_111 : f32 to vector<2x16xf32>
    %474 = arith.mulf %473, %472 : vector<2x16xf32>
    %475 = math.tanh %474 : vector<2x16xf32>
    %cst_112 = arith.constant 5.000000e-01 : f32
    %476 = vector.broadcast %cst_112 : f32 to vector<2x16xf32>
    %477 = arith.mulf %476, %475 : vector<2x16xf32>
    %cst_113 = arith.constant 5.000000e-01 : f32
    %478 = vector.broadcast %cst_113 : f32 to vector<2x16xf32>
    %479 = arith.addf %477, %478 : vector<2x16xf32>
    %480 = vector.extract_strided_slice %471 {offsets = [0, 16], sizes = [2, 8], strides = [1, 1]} : vector<2x32xf32> to vector<2x8xf32>
    %481 = math.tanh %480 : vector<2x8xf32>
    %482 = vector.extract_strided_slice %471 {offsets = [0, 24], sizes = [2, 8], strides = [1, 1]} : vector<2x32xf32> to vector<2x8xf32>
    %cst_114 = arith.constant 5.000000e-01 : f32
    %483 = vector.broadcast %cst_114 : f32 to vector<2x8xf32>
    %484 = arith.mulf %483, %482 : vector<2x8xf32>
    %485 = math.tanh %484 : vector<2x8xf32>
    %cst_115 = arith.constant 5.000000e-01 : f32
    %486 = vector.broadcast %cst_115 : f32 to vector<2x8xf32>
    %487 = arith.mulf %486, %485 : vector<2x8xf32>
    %cst_116 = arith.constant 5.000000e-01 : f32
    %488 = vector.broadcast %cst_116 : f32 to vector<2x8xf32>
    %489 = arith.addf %487, %488 : vector<2x8xf32>
    %490 = vector.extract_strided_slice %479 {offsets = [0, 8], sizes = [2, 8], strides = [1, 1]} : vector<2x16xf32> to vector<2x8xf32>
    %491 = arith.mulf %490, %433 : vector<2x8xf32>
    %492 = vector.extract_strided_slice %479 {offsets = [0, 0], sizes = [2, 8], strides = [1, 1]} : vector<2x16xf32> to vector<2x8xf32>
    %493 = arith.mulf %492, %481 : vector<2x8xf32>
    %494 = arith.addf %491, %493 : vector<2x8xf32>
    %495 = math.tanh %494 : vector<2x8xf32>
    %496 = arith.mulf %489, %495 : vector<2x8xf32>
    %497 = tpu.concatenate %467, %496 in 1 : vector<2x8xf32>, vector<2x8xf32> -> vector<2x16xf32>
    %498 = arith.truncf %497 : vector<2x16xf32> to vector<2x16xbf16>
    %cst_117 = arith.constant dense<0.000000e+00> : vector<2x64xf32>
    %499 = tpu.matmul %498, %69, %cst_117 {dimension_numbers = #tpu.dot_dimension_numbers<[1], [0], [0], [1], [0, 0, 1, 1], [], []>} : vector<2x16xbf16>, vector<16x64xbf16>, vector<2x64xf32> -> vector<2x64xf32>
    %500 = vector.extract_strided_slice %499 {offsets = [0, 0], sizes = [2, 32], strides = [1, 1]} : vector<2x64xf32> to vector<2x32xf32>
    %501 = vector.extract_strided_slice %67 {offsets = [0, 7, 0], sizes = [2, 1, 32], strides = [1, 1, 1]} : vector<2x8x32xf32> to vector<2x1x32xf32>
    %502 = vector.shape_cast %501 : vector<2x1x32xf32> to vector<2x32xf32>
    %503 = arith.addf %500, %502 : vector<2x32xf32>
    %504 = vector.extract_strided_slice %503 {offsets = [0, 0], sizes = [2, 16], strides = [1, 1]} : vector<2x32xf32> to vector<2x16xf32>
    %cst_118 = arith.constant 5.000000e-01 : f32
    %505 = vector.broadcast %cst_118 : f32 to vector<2x16xf32>
    %506 = arith.mulf %505, %504 : vector<2x16xf32>
    %507 = math.tanh %506 : vector<2x16xf32>
    %cst_119 = arith.constant 5.000000e-01 : f32
    %508 = vector.broadcast %cst_119 : f32 to vector<2x16xf32>
    %509 = arith.mulf %508, %507 : vector<2x16xf32>
    %cst_120 = arith.constant 5.000000e-01 : f32
    %510 = vector.broadcast %cst_120 : f32 to vector<2x16xf32>
    %511 = arith.addf %509, %510 : vector<2x16xf32>
    %512 = vector.extract_strided_slice %503 {offsets = [0, 16], sizes = [2, 8], strides = [1, 1]} : vector<2x32xf32> to vector<2x8xf32>
    %513 = math.tanh %512 : vector<2x8xf32>
    %514 = vector.extract_strided_slice %503 {offsets = [0, 24], sizes = [2, 8], strides = [1, 1]} : vector<2x32xf32> to vector<2x8xf32>
    %cst_121 = arith.constant 5.000000e-01 : f32
    %515 = vector.broadcast %cst_121 : f32 to vector<2x8xf32>
    %516 = arith.mulf %515, %514 : vector<2x8xf32>
    %517 = math.tanh %516 : vector<2x8xf32>
    %cst_122 = arith.constant 5.000000e-01 : f32
    %518 = vector.broadcast %cst_122 : f32 to vector<2x8xf32>
    %519 = arith.mulf %518, %517 : vector<2x8xf32>
    %cst_123 = arith.constant 5.000000e-01 : f32
    %520 = vector.broadcast %cst_123 : f32 to vector<2x8xf32>
    %521 = arith.addf %519, %520 : vector<2x8xf32>
    %522 = vector.extract_strided_slice %511 {offsets = [0, 8], sizes = [2, 8], strides = [1, 1]} : vector<2x16xf32> to vector<2x8xf32>
    %523 = arith.mulf %522, %465 : vector<2x8xf32>
    %524 = vector.extract_strided_slice %511 {offsets = [0, 0], sizes = [2, 8], strides = [1, 1]} : vector<2x16xf32> to vector<2x8xf32>
    %525 = arith.mulf %524, %513 : vector<2x8xf32>
    %526 = arith.addf %523, %525 : vector<2x8xf32>
    %527 = math.tanh %526 : vector<2x8xf32>
    %528 = arith.mulf %521, %527 : vector<2x8xf32>
    %529 = vector.extract_strided_slice %499 {offsets = [0, 32], sizes = [2, 32], strides = [1, 1]} : vector<2x64xf32> to vector<2x32xf32>
    %530 = vector.extract_strided_slice %68 {offsets = [0, 0, 0], sizes = [2, 1, 32], strides = [1, 1, 1]} : vector<2x8x32xf32> to vector<2x1x32xf32>
    %531 = vector.shape_cast %530 : vector<2x1x32xf32> to vector<2x32xf32>
    %532 = arith.addf %529, %531 : vector<2x32xf32>
    %533 = vector.extract_strided_slice %532 {offsets = [0, 0], sizes = [2, 16], strides = [1, 1]} : vector<2x32xf32> to vector<2x16xf32>
    %cst_124 = arith.constant 5.000000e-01 : f32
    %534 = vector.broadcast %cst_124 : f32 to vector<2x16xf32>
    %535 = arith.mulf %534, %533 : vector<2x16xf32>
    %536 = math.tanh %535 : vector<2x16xf32>
    %cst_125 = arith.constant 5.000000e-01 : f32
    %537 = vector.broadcast %cst_125 : f32 to vector<2x16xf32>
    %538 = arith.mulf %537, %536 : vector<2x16xf32>
    %cst_126 = arith.constant 5.000000e-01 : f32
    %539 = vector.broadcast %cst_126 : f32 to vector<2x16xf32>
    %540 = arith.addf %538, %539 : vector<2x16xf32>
    %541 = vector.extract_strided_slice %532 {offsets = [0, 16], sizes = [2, 8], strides = [1, 1]} : vector<2x32xf32> to vector<2x8xf32>
    %542 = math.tanh %541 : vector<2x8xf32>
    %543 = vector.extract_strided_slice %532 {offsets = [0, 24], sizes = [2, 8], strides = [1, 1]} : vector<2x32xf32> to vector<2x8xf32>
    %cst_127 = arith.constant 5.000000e-01 : f32
    %544 = vector.broadcast %cst_127 : f32 to vector<2x8xf32>
    %545 = arith.mulf %544, %543 : vector<2x8xf32>
    %546 = math.tanh %545 : vector<2x8xf32>
    %cst_128 = arith.constant 5.000000e-01 : f32
    %547 = vector.broadcast %cst_128 : f32 to vector<2x8xf32>
    %548 = arith.mulf %547, %546 : vector<2x8xf32>
    %cst_129 = arith.constant 5.000000e-01 : f32
    %549 = vector.broadcast %cst_129 : f32 to vector<2x8xf32>
    %550 = arith.addf %548, %549 : vector<2x8xf32>
    %551 = vector.extract_strided_slice %540 {offsets = [0, 8], sizes = [2, 8], strides = [1, 1]} : vector<2x16xf32> to vector<2x8xf32>
    %552 = arith.mulf %551, %494 : vector<2x8xf32>
    %553 = vector.extract_strided_slice %540 {offsets = [0, 0], sizes = [2, 8], strides = [1, 1]} : vector<2x16xf32> to vector<2x8xf32>
    %554 = arith.mulf %553, %542 : vector<2x8xf32>
    %555 = arith.addf %552, %554 : vector<2x8xf32>
    %556 = math.tanh %555 : vector<2x8xf32>
    %557 = arith.mulf %550, %556 : vector<2x8xf32>
    %558 = tpu.concatenate %101, %162, %223, %284, %345, %406, %467, %528 in 0 : vector<2x8xf32>, vector<2x8xf32>, vector<2x8xf32>, vector<2x8xf32>, vector<2x8xf32>, vector<2x8xf32>, vector<2x8xf32>, vector<2x8xf32> -> vector<16x8xf32>
    %559 = tpu.concatenate %557, %496, %435, %374, %313, %252, %191, %130 in 0 : vector<2x8xf32>, vector<2x8xf32>, vector<2x8xf32>, vector<2x8xf32>, vector<2x8xf32>, vector<2x8xf32>, vector<2x8xf32>, vector<2x8xf32> -> vector<16x8xf32>
    %560 = tpu.concatenate %558, %559 in 1 : vector<16x8xf32>, vector<16x8xf32> -> vector<16x16xf32>
    %561 = math.tanh %560 : vector<16x16xf32>
    %562 = arith.truncf %561 : vector<16x16xf32> to vector<16x16xbf16>
    %c0_130 = arith.constant 0 : index
    %c0_131 = arith.constant 0 : index
    %563 = vector.load %arg7[%c0_130, %c0_131] : memref<16x16xbf16, #tpu.memory_space<vmem>>, vector<16x16xbf16>
    %cst_132 = arith.constant dense<0.000000e+00> : vector<16x16xf32>
    %564 = tpu.matmul %562, %563, %cst_132 {dimension_numbers = #tpu.dot_dimension_numbers<[1], [0], [0], [1], [0, 0, 1, 1], [], []>} : vector<16x16xbf16>, vector<16x16xbf16>, vector<16x16xf32> -> vector<16x16xf32>
    %c0_133 = arith.constant 0 : index
    %c0_134 = arith.constant 0 : index
    %565 = vector.load %arg8[%c0_133, %c0_134] : memref<1x16xf32, #tpu.memory_space<vmem>>, vector<1x16xf32>
    %566 = vector.broadcast %565 : vector<1x16xf32> to vector<16x16xf32>
    %567 = arith.addf %564, %566 : vector<16x16xf32>
    %cst_135 = arith.constant 5.000000e-01 : f32
    %568 = vector.broadcast %cst_135 : f32 to vector<16x16xf32>
    %569 = arith.mulf %568, %567 : vector<16x16xf32>
    %570 = math.tanh %569 : vector<16x16xf32>
    %cst_136 = arith.constant 5.000000e-01 : f32
    %571 = vector.broadcast %cst_136 : f32 to vector<16x16xf32>
    %572 = arith.mulf %571, %570 : vector<16x16xf32>
    %cst_137 = arith.constant 5.000000e-01 : f32
    %573 = vector.broadcast %cst_137 : f32 to vector<16x16xf32>
    %574 = arith.addf %572, %573 : vector<16x16xf32>
    %575 = arith.mulf %561, %574 : vector<16x16xf32>
    %cst_138 = arith.constant dense<0.000000e+00> : vector<16xf32>
    %576 = vector.multi_reduction <add>, %575, %cst_138 [1] : vector<16x16xf32> to vector<16xf32>
    %577 = vector.shape_cast %576 : vector<16xf32> to vector<16x1xf32>
    %cst_139 = arith.constant 6.250000e-02 : f32
    %578 = vector.broadcast %cst_139 : f32 to vector<16x1xf32>
    %579 = arith.mulf %577, %578 : vector<16x1xf32>
    %c0_140 = arith.constant 0 : index
    %c0_141 = arith.constant 0 : index
    %580 = vector.load %arg9[%c0_140, %c0_141] : memref<16x256xbf16, #tpu.memory_space<vmem>>, vector<16x256xbf16>
    %581 = arith.extf %580 : vector<16x256xbf16> to vector<16x256xf32>
    %582 = vector.broadcast %579 : vector<16x1xf32> to vector<16x256xf32>
    %583 = arith.mulf %582, %581 : vector<16x256xf32>
    %584 = arith.truncf %583 : vector<16x256xf32> to vector<16x256xbf16>
    %c0_142 = arith.constant 0 : index
    %c0_143 = arith.constant 0 : index
    %585 = vector.load %arg11[%c0_142, %c0_143] : memref<2x16xbf16, #tpu.memory_space<vmem>>, vector<2x16xbf16>
    %cst_144 = arith.constant dense<0.000000e+00> : vector<2x256xf32>
    %586 = tpu.matmul %585, %584, %cst_144 {dimension_numbers = #tpu.dot_dimension_numbers<[1], [0], [0], [1], [0, 0, 1, 1], [], []>} : vector<2x16xbf16>, vector<16x256xbf16>, vector<2x256xf32> -> vector<2x256xf32>
    %c0_145 = arith.constant 0 : index
    %c0_146 = arith.constant 0 : index
    %587 = vector.load %arg10[%c0_145, %c0_146] : memref<1x256xf32, #tpu.memory_space<vmem>>, vector<1x256xf32>
    %588 = vector.broadcast %587 : vector<1x256xf32> to vector<2x256xf32>
    %589 = arith.addf %586, %588 : vector<2x256xf32>
    %cst_147 = arith.constant 5.000000e-01 : f32
    %590 = vector.broadcast %cst_147 : f32 to vector<2x256xf32>
    %591 = arith.mulf %590, %589 : vector<2x256xf32>
    %592 = math.tanh %591 : vector<2x256xf32>
    %cst_148 = arith.constant 5.000000e-01 : f32
    %593 = vector.broadcast %cst_148 : f32 to vector<2x256xf32>
    %594 = arith.mulf %593, %592 : vector<2x256xf32>
    %cst_149 = arith.constant 5.000000e-01 : f32
    %595 = vector.broadcast %cst_149 : f32 to vector<2x256xf32>
    %596 = arith.addf %594, %595 : vector<2x256xf32>
    %c0_150 = arith.constant 0 : index
    %c0_151 = arith.constant 0 : index
    %597 = vector.load %arg12[%c0_150, %c0_151] : memref<2x256xf32, #tpu.memory_space<vmem>>, vector<2x256xf32>
    tpu.vector_store %arg12[%c0_150, %c0_151], %596 {strides = array<i32>} : memref<2x256xf32, #tpu.memory_space<vmem>>, vector<2x256xf32>,
    return
  }
  func.func @transform_0(%arg0: i32) -> (i32, i32) {
    %c0_i32 = arith.constant 0 : i32
    %c0_i32_0 = arith.constant 0 : i32
    return %c0_i32, %arg0 : i32, i32
  }
  func.func @transform_1(%arg0: i32) -> (i32, i32, i32) {
    %c0_i32 = arith.constant 0 : i32
    %c0_i32_0 = arith.constant 0 : i32
    %c0_i32_1 = arith.constant 0 : i32
    %c0_i32_2 = arith.constant 0 : i32
    return %c0_i32, %c0_i32_0, %c0_i32_1 : i32, i32, i32
  }
  func.func @transform_2(%arg0: i32) -> (i32, i32) {
    %c0_i32 = arith.constant 0 : i32
    %c0_i32_0 = arith.constant 0 : i32
    %c0_i32_1 = arith.constant 0 : i32
    return %c0_i32, %c0_i32_0 : i32, i32
  }
  func.func @transform_3(%arg0: i32) -> (i32, i32) {
    %c0_i32 = arith.constant 0 : i32
    %c0_i32_0 = arith.constant 0 : i32
    %c0_i32_1 = arith.constant 0 : i32
    return %c0_i32, %c0_i32_0 : i32, i32
  }
  func.func @transform_4(%arg0: i32) -> (i32, i32) {
    %c0_i32 = arith.constant 0 : i32
    %c0_i32_0 = arith.constant 0 : i32
    %c0_i32_1 = arith.constant 0 : i32
    return %c0_i32, %c0_i32_0 : i32, i32
  }
  func.func @transform_5(%arg0: i32) -> (i32, i32) {
    %c0_i32 = arith.constant 0 : i32
    %c0_i32_0 = arith.constant 0 : i32
    %c0_i32_1 = arith.constant 0 : i32
    return %c0_i32, %c0_i32_0 : i32, i32
  }
  func.func @transform_6(%arg0: i32) -> (i32, i32) {
    %c0_i32 = arith.constant 0 : i32
    %c0_i32_0 = arith.constant 0 : i32
    %c0_i32_1 = arith.constant 0 : i32
    return %c0_i32, %c0_i32_0 : i32, i32
  }
  func.func @transform_7(%arg0: i32) -> (i32, i32) {
    %c0_i32 = arith.constant 0 : i32
    %c0_i32_0 = arith.constant 0 : i32
    %c0_i32_1 = arith.constant 0 : i32
    return %c0_i32, %c0_i32_0 : i32, i32
  }
  func.func @transform_8(%arg0: i32) -> (i32, i32) {
    %c0_i32 = arith.constant 0 : i32
    %c0_i32_0 = arith.constant 0 : i32
    %c0_i32_1 = arith.constant 0 : i32
    return %c0_i32, %c0_i32_0 : i32, i32
  }
  func.func @transform_9(%arg0: i32) -> (i32, i32) {
    %c0_i32 = arith.constant 0 : i32
    %c0_i32_0 = arith.constant 0 : i32
    %c0_i32_1 = arith.constant 0 : i32
    return %c0_i32, %c0_i32_0 : i32, i32
  }
  func.func @transform_10(%arg0: i32) -> (i32, i32) {
    %c0_i32 = arith.constant 0 : i32
    %c0_i32_0 = arith.constant 0 : i32
    %c0_i32_1 = arith.constant 0 : i32
    return %c0_i32, %c0_i32_0 : i32, i32
  }
  func.func @transform_11(%arg0: i32) -> (i32, i32) {
    %c0_i32 = arith.constant 0 : i32
    %c0_i32_0 = arith.constant 0 : i32
    return %arg0, %c0_i32 : i32, i32
  }
}

</mosaic_0001>

<llo_original>
// kernel: cnn_lstm_eca_forward.1
$region0: #{cnn_lstm_eca_forward.1}
  #allocation0 [shape = 'u32[]', space=smem, size = 0x4, offset = 0x4, fixed_abs, tag = 'smem constant byte address 0x4 - core index']
  #allocation1 [shape = 'u32[144,128]{1,0:T(1,128)}', space=vmem, size = 0x12000, scoped, tag = 'internal scratch']
  %s0 = inlined_call_operand.vmem [shape: f32[16,32], index: 0, kind: input, shape index: {}]
  %s1 = inlined_call_operand.vmem [shape: bf16[3,8,16], index: 1, kind: input, shape index: {}]
  %s2 = inlined_call_operand.vmem [shape: f32[8,1], index: 2, kind: input, shape index: {}]
  %s3 = inlined_call_operand.vmem [shape: bf16[16,64], index: 3, kind: input, shape index: {}]
  %s4 = inlined_call_operand.vmem [shape: f32[1,64], index: 4, kind: input, shape index: {}]
  %s5 = inlined_call_operand.vmem [shape: bf16[16,64], index: 5, kind: input, shape index: {}]
  %s6 = inlined_call_operand.vmem [shape: bf16[16,16], index: 6, kind: input, shape index: {}]
  %s7 = inlined_call_operand.vmem [shape: f32[1,16], index: 7, kind: input, shape index: {}]
  %s8 = inlined_call_operand.vmem [shape: bf16[16,256], index: 8, kind: input, shape index: {}]
  %s9 = inlined_call_operand.vmem [shape: f32[1,256], index: 9, kind: input, shape index: {}]
  %s10 = inlined_call_operand.vmem [shape: bf16[2,16], index: 10, kind: input, shape index: {}]
  %s11 = inlined_call_operand.hbm [shape: f32[2,256], index: 11, kind: output, shape index: {}]
  %s12 = sld [smem:[#allocation0]]
  $region54: #{cnn_lstm_eca_forward.1} parent=0
    _
  %s14 = ssub.s32 1, %s12
  %s15 = scalar_select 0, %s14, %s12
  $region1: #{cnn_lstm_eca_forward.1} parent=0
    #allocation2 [shape = 'u8[2048]{0}', space=vmem, size = 0x800, scoped, tag = 'output window, operand 0, single buffered']
    #allocation3 [shape = 's32[1]{0}', space=sflag, size = 0x4, scoped, tag = 'scoped memory for cnn_lstm_eca_forward.1']
    %16 = vsyncpa [#allocation3], 0
    // Predicated region
    $region2: #{cnn_lstm_eca_forward.1} parent=1 // pred_check
      _
    $region3: #{cnn_lstm_eca_forward.1} parent=1 // pred_check_branch
      %18 = sbr.rel (0) target = $region5
    $region4: #{cnn_lstm_eca_forward.1} parent=1 // pred_region
      _
    $region5: #{cnn_lstm_eca_forward.1} parent=1 // pred_fallthru
      _
    // Predicated region
    $region6: #{cnn_lstm_eca_forward.1} parent=1 // pred_check
      _
    $region7: #{cnn_lstm_eca_forward.1} parent=1 // pred_check_branch
      %20 = sbr.rel (0) target = $region9
    $region8: #{cnn_lstm_eca_forward.1} parent=1 // pred_region
      _
    $region9: #{cnn_lstm_eca_forward.1} parent=1 // pred_fallthru
      _
    // Predicated region
    $region10: #{cnn_lstm_eca_forward.1} parent=1 // pred_check
      _
    $region11: #{cnn_lstm_eca_forward.1} parent=1 // pred_check_branch
      %22 = sbr.rel (0) target = $region13
    $region12: #{cnn_lstm_eca_forward.1} parent=1 // pred_region
      _
    $region13: #{cnn_lstm_eca_forward.1} parent=1 // pred_fallthru
      _
    // Predicated region
    $region14: #{cnn_lstm_eca_forward.1} parent=1 // pred_check
      _
    $region15: #{cnn_lstm_eca_forward.1} parent=1 // pred_check_branch
      %24 = sbr.rel (0) target = $region17
    $region16: #{cnn_lstm_eca_forward.1} parent=1 // pred_region
      _
    $region17: #{cnn_lstm_eca_forward.1} parent=1 // pred_fallthru
      _
    // Predicated region
    $region18: #{cnn_lstm_eca_forward.1} parent=1 // pred_check
      _
    $region19: #{cnn_lstm_eca_forward.1} parent=1 // pred_check_branch
      %26 = sbr.rel (0) target = $region21
    $region20: #{cnn_lstm_eca_forward.1} parent=1 // pred_region
      _
    $region21: #{cnn_lstm_eca_forward.1} parent=1 // pred_fallthru
      _
    // Predicated region
    $region22: #{cnn_lstm_eca_forward.1} parent=1 // pred_check
      _
    $region23: #{cnn_lstm_eca_forward.1} parent=1 // pred_check_branch
      %28 = sbr.rel (0) target = $region25
    $region24: #{cnn_lstm_eca_forward.1} parent=1 // pred_region
      _
    $region25: #{cnn_lstm_eca_forward.1} parent=1 // pred_fallthru
      _
    // Predicated region
    $region26: #{cnn_lstm_eca_forward.1} parent=1 // pred_check
      _
    $region27: #{cnn_lstm_eca_forward.1} parent=1 // pred_check_branch
      %30 = sbr.rel (0) target = $region29
    $region28: #{cnn_lstm_eca_forward.1} parent=1 // pred_region
      _
    $region29: #{cnn_lstm_eca_forward.1} parent=1 // pred_fallthru
      _
    // Predicated region
    $region30: #{cnn_lstm_eca_forward.1} parent=1 // pred_check
      _
    $region31: #{cnn_lstm_eca_forward.1} parent=1 // pred_check_branch
      %32 = sbr.rel (0) target = $region33
    $region32: #{cnn_lstm_eca_forward.1} parent=1 // pred_region
      _
    $region33: #{cnn_lstm_eca_forward.1} parent=1 // pred_fallthru
      _
    // Predicated region
    $region34: #{cnn_lstm_eca_forward.1} parent=1 // pred_check
      _
    $region35: #{cnn_lstm_eca_forward.1} parent=1 // pred_check_branch
      %34 = sbr.rel (0) target = $region37
    $region36: #{cnn_lstm_eca_forward.1} parent=1 // pred_region
      _
    $region37: #{cnn_lstm_eca_forward.1} parent=1 // pred_fallthru
      _
    // Predicated region
    $region38: #{cnn_lstm_eca_forward.1} parent=1 // pred_check
      _
    $region39: #{cnn_lstm_eca_forward.1} parent=1 // pred_check_branch
      %36 = sbr.rel (0) target = $region41
    $region40: #{cnn_lstm_eca_forward.1} parent=1 // pred_region
      _
    $region41: #{cnn_lstm_eca_forward.1} parent=1 // pred_fallthru
      _
    // Predicated region
    $region42: #{cnn_lstm_eca_forward.1} parent=1 // pred_check
      _
    $region43: #{cnn_lstm_eca_forward.1} parent=1 // pred_check_branch
      %38 = sbr.rel (0) target = $region45
    $region44: #{cnn_lstm_eca_forward.1} parent=1 // pred_region
      _
    $region45: #{cnn_lstm_eca_forward.1} parent=1 // pred_fallthru
      _
    %v40 = vld [vmem:[%s0] sm:$0xff]
    %v41 = vld [vmem:[%s0 + $0x8] sm:$0xff]
    %v42 = vlaneseq
    %v43 = vand.u32 %v42, 127
    %vm44 = vcmp.lt.s32.totalorder %v43, 0
    %v45 = vsub.s32 0, %v43
    %v46 = vsel %vm44, %v45, %v43
    %v47 = vshrl.u32 %v46, 4
    %v48 = vand.u32 %v46, 15
    %v49 = vsub.s32 0, %v48
    %v50 = vsel %vm44, %v49, %v48
    %vm51 = vcmp.ne.s32.totalorder %v50, 0
    %vm52 = vcmp.lt.s32.totalorder %v50, 0
    %vm53 = vmand %vm52, %vm51
    %v54 = vadd.s32 %v50, 16
    %v55 = vsel %vm53, %v54, %v50
    %vm56 = vcmp.eq.s32.totalorder %v55, 0
    %59 = vrot.lane.b32.xlu0 %v40, 97
    %v60 = vpop.permute.xlu0 %59
    %61 = vrot.lane.b32.xlu0 %v41, 97
    %v62 = vpop.permute.xlu0 %61
    %65 = vrot.lane.b32.xlu0 %v40, 1
    %v66 = vpop.permute.xlu0 %65
    %67 = vrot.lane.b32.xlu0 %v41, 1
    %v68 = vpop.permute.xlu0 %67
    %vm71 = vcmask 7168
    %v72 = vsel %vm71, %v60, %v66
    %v73 = vsel %vm71, %v62, %v68
    %v74 = vsel %vm56, 0.0, %v72
    %v75 = vsel %vm56, 0.0, %v73
    %vm76 = vcmp.eq.s32.totalorder %v55, 15
    %77 = vrot.lane.b32.xlu0 %v40, 127
    %v78 = vpop.permute.xlu0 %77
    %79 = vrot.lane.b32.xlu0 %v41, 127
    %v80 = vpop.permute.xlu0 %79
    %83 = vrot.lane.b32.xlu0 %v40, 31
    %v84 = vpop.permute.xlu0 %83
    %85 = vrot.lane.b32.xlu0 %v41, 31
    %v86 = vpop.permute.xlu0 %85
    %vm89 = vcmask 252928
    %v90 = vsel %vm89, %v78, %v84
    %v91 = vsel %vm89, %v80, %v86
    %v92 = vsel %vm76, 0.0, %v90
    %v93 = vsel %vm76, 0.0, %v91
    %v94 = vld [vmem:[%s1] sm:$0xf]
    %v95 = vld [vmem:[%s1 + $0x4] sm:$0xf]
    %v96 = vld [vmem:[%s1 + $0x8] sm:$0xf]
    %v97 = vpack.c.bf16 %v75, %v74
    %v98 = vpack.c.bf16 %v41, %v40
    %vm99 = vcmask 130048
    %v101 = vsel %vm99, %v95, 0
    %103 = vmatprep.subr.bf16.mxu0 0
    %104 = vmatpush1.bf16.msra.mxu0 %v98
    %105 = vmatprep.subr.bf16.mxu0 0
    %106 = vmatpush1.bf16.msra.mxu0 0
    %107 = vmatprep.subr.bf16.mxu0 0
    %108 = vmatpush1.bf16.msra.mxu0 0
    %109 = vmatprep.subr.bf16.mxu0 0
    %110 = vmatpush1.bf16.msra.mxu0 0
    %111 = vmatprep.subr.bf16.mxu0 0
    %112 = vmatpush1.bf16.msra.mxu0 0
    %113 = vmatprep.subr.bf16.mxu0 0
    %114 = vmatpush1.bf16.msra.mxu0 0
    %115 = vmatprep.subr.bf16.mxu0 0
    %116 = vmatpush1.bf16.msra.mxu0 0
    %117 = vmatprep.subr.bf16.mxu0 0
    %118 = vmatpush1.bf16.msra.mxu0 0
    %119 = vmatprep.subr.bf16.mxu0 0
    %120 = vmatpush1.bf16.msra.mxu0 0
    %121 = vmatprep.subr.bf16.mxu0 0
    %122 = vmatpush1.bf16.msra.mxu0 0
    %123 = vmatprep.subr.bf16.mxu0 0
    %124 = vmatpush1.bf16.msra.mxu0 0
    %125 = vmatprep.subr.bf16.mxu0 0
    %126 = vmatpush1.bf16.msra.mxu0 0
    %127 = vmatprep.subr.bf16.mxu0 0
    %128 = vmatpush1.bf16.msra.mxu0 0
    %129 = vmatprep.subr.bf16.mxu0 0
    %130 = vmatpush1.bf16.msra.mxu0 0
    %131 = vmatprep.subr.bf16.mxu0 0
    %132 = vmatpush1.bf16.msra.mxu0 0
    %133 = vmatprep.subr.bf16.mxu0 0
    %134 = vmatpush1.bf16.msra.mxu0 0
    %135 = vmatprep.mubr.bf16.mxu0 0
    %136 = vmatmul.mubr.bf16.gmra.mrb[0].mxu0 %v101
    %v137 = vpop.f32.mrb[0].mxu0
    %v138 = vadd.f32 0.0, %v137
    %v139 = vpop.f32.mrb[0].mxu0
    %v140 = vpop.f32.mrb[0].mxu0
    %v141 = vpop.f32.mrb[0].mxu0
    %142 = vdwg.mxu0
    %v144 = vsel %vm99, %v94, 0
    %146 = vmatprep.subr.bf16.mxu0 0
    %147 = vmatpush1.bf16.msra.mxu0 %v97
    %148 = vmatprep.subr.bf16.mxu0 0
    %149 = vmatpush1.bf16.msra.mxu0 0
    %150 = vmatprep.subr.bf16.mxu0 0
    %151 = vmatpush1.bf16.msra.mxu0 0
    %152 = vmatprep.subr.bf16.mxu0 0
    %153 = vmatpush1.bf16.msra.mxu0 0
    %154 = vmatprep.subr.bf16.mxu0 0
    %155 = vmatpush1.bf16.msra.mxu0 0
    %156 = vmatprep.subr.bf16.mxu0 0
    %157 = vmatpush1.bf16.msra.mxu0 0
    %158 = vmatprep.subr.bf16.mxu0 0
    %159 = vmatpush1.bf16.msra.mxu0 0
    %160 = vmatprep.subr.bf16.mxu0 0
    %161 = vmatpush1.bf16.msra.mxu0 0
    %162 = vmatprep.subr.bf16.mxu0 0
    %163 = vmatpush1.bf16.msra.mxu0 0
    %164 = vmatprep.subr.bf16.mxu0 0
    %165 = vmatpush1.bf16.msra.mxu0 0
    %166 = vmatprep.subr.bf16.mxu0 0
    %167 = vmatpush1.bf16.msra.mxu0 0
    %168 = vmatprep.subr.bf16.mxu0 0
    %169 = vmatpush1.bf16.msra.mxu0 0
    %170 = vmatprep.subr.bf16.mxu0 0
    %171 = vmatpush1.bf16.msra.mxu0 0
    %172 = vmatprep.subr.bf16.mxu0 0
    %173 = vmatpush1.bf16.msra.mxu0 0
    %174 = vmatprep.subr.bf16.mxu0 0
    %175 = vmatpush1.bf16.msra.mxu0 0
    %176 = vmatprep.subr.bf16.mxu0 0
    %177 = vmatpush1.bf16.msra.mxu0 0
    %178 = vmatprep.mubr.bf16.mxu0 0
    %179 = vmatmul.mubr.bf16.gmra.mrb[0].mxu0 %v144
    %v180 = vpop.f32.mrb[0].mxu0
    %v181 = vadd.f32 %v138, %v180
    %v182 = vpop.f32.mrb[0].mxu0
    %v183 = vpop.f32.mrb[0].mxu0
    %v184 = vpop.f32.mrb[0].mxu0
    %185 = vdwg.mxu0
    %v186 = vpack.c.bf16 %v93, %v92
    %v188 = vsel %vm99, %v96, 0
    %190 = vmatprep.subr.bf16.mxu0 0
    %191 = vmatpush1.bf16.msra.mxu0 %v186
    %192 = vmatprep.subr.bf16.mxu0 0
    %193 = vmatpush1.bf16.msra.mxu0 0
    %194 = vmatprep.subr.bf16.mxu0 0
    %195 = vmatpush1.bf16.msra.mxu0 0
    %196 = vmatprep.subr.bf16.mxu0 0
    %197 = vmatpush1.bf16.msra.mxu0 0
    %198 = vmatprep.subr.bf16.mxu0 0
    %199 = vmatpush1.bf16.msra.mxu0 0
    %200 = vmatprep.subr.bf16.mxu0 0
    %201 = vmatpush1.bf16.msra.mxu0 0
    %202 = vmatprep.subr.bf16.mxu0 0
    %203 = vmatpush1.bf16.msra.mxu0 0
    %204 = vmatprep.subr.bf16.mxu0 0
    %205 = vmatpush1.bf16.msra.mxu0 0
    %206 = vmatprep.subr.bf16.mxu0 0
    %207 = vmatpush1.bf16.msra.mxu0 0
    %208 = vmatprep.subr.bf16.mxu0 0
    %209 = vmatpush1.bf16.msra.mxu0 0
    %210 = vmatprep.subr.bf16.mxu0 0
    %211 = vmatpush1.bf16.msra.mxu0 0
    %212 = vmatprep.subr.bf16.mxu0 0
    %213 = vmatpush1.bf16.msra.mxu0 0
    %214 = vmatprep.subr.bf16.mxu0 0
    %215 = vmatpush1.bf16.msra.mxu0 0
    %216 = vmatprep.subr.bf16.mxu0 0
    %217 = vmatpush1.bf16.msra.mxu0 0
    %218 = vmatprep.subr.bf16.mxu0 0
    %219 = vmatpush1.bf16.msra.mxu0 0
    %220 = vmatprep.subr.bf16.mxu0 0
    %221 = vmatpush1.bf16.msra.mxu0 0
    %222 = vmatprep.mubr.bf16.mxu0 0
    %223 = vmatmul.mubr.bf16.gmra.mrb[0].mxu0 %v188
    %v224 = vpop.f32.mrb[0].mxu0
    %v225 = vadd.f32 0.0, %v224
    %v226 = vpop.f32.mrb[0].mxu0
    %v227 = vpop.f32.mrb[0].mxu0
    %v228 = vpop.f32.mrb[0].mxu0
    %229 = vdwg.mxu0
    %v230 = vadd.f32 %v181, %v225
    %v231 = vld [vmem:[%s2] sm:$0xff]
    %233 = vset.pattern.permute.xlu0 0
    %234 = vperm.xlu0 %233, %v231
    %v235 = vpop.permute.xlu0 %234
    %v237 = vadd.f32 %v230, %v235
    %v238 = vmul.f32 %v237, 0.5
    %v239 = vtanh.pop %v238
    %v240 = vmul.f32 %v239, 0.5
    %v241 = vadd.f32 %v240, 0.5
    %243 = vrot.lane.b32.xlu0 %v241, 112
    %v244 = vpop.permute.xlu0 %243
    %v246 = vpack.c.bf16 %v244, %v241
    %v247 = vld [vmem:[%s3] sm:$0xf]
    %v248 = vld [vmem:[%s3 + $0x4] sm:$0xf]
    %v249 = vld [vmem:[%s4] sm:$0x1]
    %v251 = vlaneseq
    %v252 = vshrl.u32 %v251, 7
    %v253 = vsub.s32 0, %v252
    %v254 = vrot.slane %v249, %v253
    %v258 = vunpack.c.l.b16 %v247
    %v259 = vunpack.c.l.b16 %v248
    %v260 = vpack.c.b16 %v259, %v258
    %v263 = vsel %vm99, %v246, 0
    %265 = vmatprep.subr.bf16.mxu0 0
    %266 = vmatpush1.bf16.msra.mxu0 %v260
    %267 = vmatprep.subr.bf16.mxu0 0
    %268 = vmatpush1.bf16.msra.mxu0 0
    %269 = vmatprep.subr.bf16.mxu0 0
    %270 = vmatpush1.bf16.msra.mxu0 0
    %271 = vmatprep.subr.bf16.mxu0 0
    %272 = vmatpush1.bf16.msra.mxu0 0
    %273 = vmatprep.subr.bf16.mxu0 0
    %274 = vmatpush1.bf16.msra.mxu0 0
    %275 = vmatprep.subr.bf16.mxu0 0
    %276 = vmatpush1.bf16.msra.mxu0 0
    %277 = vmatprep.subr.bf16.mxu0 0
    %278 = vmatpush1.bf16.msra.mxu0 0
    %279 = vmatprep.subr.bf16.mxu0 0
    %280 = vmatpush1.bf16.msra.mxu0 0
    %281 = vmatprep.subr.bf16.mxu0 0
    %282 = vmatpush1.bf16.msra.mxu0 0
    %283 = vmatprep.subr.bf16.mxu0 0
    %284 = vmatpush1.bf16.msra.mxu0 0
    %285 = vmatprep.subr.bf16.mxu0 0
    %286 = vmatpush1.bf16.msra.mxu0 0
    %287 = vmatprep.subr.bf16.mxu0 0
    %288 = vmatpush1.bf16.msra.mxu0 0
    %289 = vmatprep.subr.bf16.mxu0 0
    %290 = vmatpush1.bf16.msra.mxu0 0
    %291 = vmatprep.subr.bf16.mxu0 0
    %292 = vmatpush1.bf16.msra.mxu0 0
    %293 = vmatprep.subr.bf16.mxu0 0
    %294 = vmatpush1.bf16.msra.mxu0 0
    %295 = vmatprep.subr.bf16.mxu0 0
    %296 = vmatpush1.bf16.msra.mxu0 0
    %297 = vmatprep.mubr.bf16.mxu0 0
    %298 = vmatmul.mubr.bf16.gmra.mrb[0].mxu0 %v263
    %v299 = vpop.f32.mrb[0].mxu0
    %v300 = vadd.f32 %v254, %v299
    %v301 = vpop.f32.mrb[0].mxu0
    %v302 = vpop.f32.mrb[0].mxu0
    %v303 = vadd.f32 %v254, %v302
    %v304 = vpop.f32.mrb[0].mxu0
    %305 = vdwg.mxu0
    %v306 = vld [vmem:[%s5] sm:$0xf]
    %v307 = vld [vmem:[%s5 + $0x4] sm:$0xf]
    %v308 = vadd.f32 %v300, 0.0
    %v309 = vadd.f32 %v303, 0.0
    %v310 = vmul.f32 %v308, 0.5
    %v311 = vmul.f32 %v309, 0.5
    %v312 = vtanh.pop %v310
    %v313 = vtanh.pop %v311
    %v314 = vmul.f32 %v312, 0.5
    %v315 = vmul.f32 %v313, 0.5
    %v316 = vadd.f32 %v314, 0.5
    %v317 = vadd.f32 %v315, 0.5
    %v318 = vtanh.pop %v308
    %v319 = vtanh.pop %v309
    %v320 = vmul.f32 %v316, 0.0
    %v321 = vmul.f32 %v317, 0.0
    %324 = vrot.lane.b32.xlu0 %v318, 112
    %v325 = vpop.permute.xlu0 %324
    %326 = vrot.lane.b32.xlu0 %v319, 112
    %v327 = vpop.permute.xlu0 %326
    %v330 = vmul.f32 %v316, %v325
    %v331 = vmul.f32 %v317, %v327
    %334 = vrot.lane.b32.xlu0 %v330, 8
    %v335 = vpop.permute.xlu0 %334
    %336 = vrot.lane.b32.xlu0 %v331, 8
    %v337 = vpop.permute.xlu0 %336
    %v340 = vadd.f32 %v320, %v335
    %v341 = vadd.f32 %v321, %v337
    %v342 = vtanh.pop %v340
    %v343 = vtanh.pop %v341
    %346 = vrot.lane.b32.xlu0 %v342, 16
    %v347 = vpop.permute.xlu0 %346
    %348 = vrot.lane.b32.xlu0 %v343, 16
    %v349 = vpop.permute.xlu0 %348
    %v352 = vmul.f32 %v316, %v347
    %v353 = vmul.f32 %v317, %v349
    %v356 = vrot.slane %v353, 7
    %vm357 = vcmask 1041409
    %v358 = vsel %vm357, %v356, %v352
    %359 = vrot.lane.b32.xlu0 %v358, 104
    %v360 = vpop.permute.xlu0 %359
    %v362 = vrot.slane %v352, 7
    %v363 = vrot.slane %v353, 6
    %v364 = vsel %vm357, %v363, %v362
    %365 = vrot.lane.b32.xlu0 %v364, 80
    %v366 = vpop.permute.xlu0 %365
    %vm368 = vcmask 64512
    %v369 = vsel %vm368, %v360, %v366
    %v370 = vpack.c.bf16 %v369, %v369
    %v373 = vunpack.c.l.b16 %v306
    %v374 = vunpack.c.l.b16 %v307
    %v375 = vpack.c.b16 %v374, %v373
    %v378 = vsel %vm99, %v370, 0
    %380 = vmatprep.subr.bf16.mxu0 0
    %381 = vmatpush1.bf16.msra.mxu0 %v375
    %382 = vmatprep.subr.bf16.mxu0 0
    %383 = vmatpush1.bf16.msra.mxu0 0
    %384 = vmatprep.subr.bf16.mxu0 0
    %385 = vmatpush1.bf16.msra.mxu0 0
    %386 = vmatprep.subr.bf16.mxu0 0
    %387 = vmatpush1.bf16.msra.mxu0 0
    %388 = vmatprep.subr.bf16.mxu0 0
    %389 = vmatpush1.bf16.msra.mxu0 0
    %390 = vmatprep.subr.bf16.mxu0 0
    %391 = vmatpush1.bf16.msra.mxu0 0
    %392 = vmatprep.subr.bf16.mxu0 0
    %393 = vmatpush1.bf16.msra.mxu0 0
    %394 = vmatprep.subr.bf16.mxu0 0
    %395 = vmatpush1.bf16.msra.mxu0 0
    %396 = vmatprep.subr.bf16.mxu0 0
    %397 = vmatpush1.bf16.msra.mxu0 0
    %398 = vmatprep.subr.bf16.mxu0 0
    %399 = vmatpush1.bf16.msra.mxu0 0
    %400 = vmatprep.subr.bf16.mxu0 0
    %401 = vmatpush1.bf16.msra.mxu0 0
    %402 = vmatprep.subr.bf16.mxu0 0
    %403 = vmatpush1.bf16.msra.mxu0 0
    %404 = vmatprep.subr.bf16.mxu0 0
    %405 = vmatpush1.bf16.msra.mxu0 0
    %406 = vmatprep.subr.bf16.mxu0 0
    %407 = vmatpush1.bf16.msra.mxu0 0
    %408 = vmatprep.subr.bf16.mxu0 0
    %409 = vmatpush1.bf16.msra.mxu0 0
    %410 = vmatprep.subr.bf16.mxu0 0
    %411 = vmatpush1.bf16.msra.mxu0 0
    %412 = vmatprep.mubr.bf16.mxu0 0
    %413 = vmatmul.mubr.bf16.gmra.mrb[0].mxu0 %v378
    %v414 = vpop.f32.mrb[0].mxu0
    %v415 = vadd.f32 0.0, %v414
    %v416 = vpop.f32.mrb[0].mxu0
    %v417 = vpop.f32.mrb[0].mxu0
    %v418 = vpop.f32.mrb[0].mxu0
    %419 = vdwg.mxu0
    %v422 = vrot.slane %v300, 1
    %v423 = vsel %vm357, %v303, %v422
    %v425 = vadd.f32 %v415, %v423
    %v426 = vmul.f32 %v425, 0.5
    %v427 = vtanh.pop %v426
    %v428 = vmul.f32 %v427, 0.5
    %v429 = vadd.f32 %v428, 0.5
    %v430 = vtanh.pop %v425
    %v433 = vrot.slane %v341, 7
    %v434 = vsel %vm357, %v433, %v340
    %v436 = vmul.f32 %v429, %v434
    %438 = vrot.lane.b32.xlu0 %v430, 112
    %v439 = vpop.permute.xlu0 %438
    %v441 = vmul.f32 %v429, %v439
    %443 = vrot.lane.b32.xlu0 %v441, 8
    %v444 = vpop.permute.xlu0 %443
    %v446 = vadd.f32 %v436, %v444
    %v447 = vtanh.pop %v446
    %449 = vrot.lane.b32.xlu0 %v447, 16
    %v450 = vpop.permute.xlu0 %449
    %v452 = vmul.f32 %v429, %v450
    %v453 = vrot.slane %v300, 6
    %v454 = vrot.slane %v303, 5
    %v455 = vsel %vm357, %v454, %v453
    %v457 = vadd.f32 %v415, %v455
    %v458 = vmul.f32 %v457, 0.5
    %v459 = vtanh.pop %v458
    %v460 = vmul.f32 %v459, 0.5
    %v461 = vadd.f32 %v460, 0.5
    %v462 = vtanh.pop %v457
    %v463 = vrot.slane %v340, 7
    %v464 = vrot.slane %v341, 6
    %v465 = vsel %vm357, %v464, %v463
    %v467 = vmul.f32 %v461, %v465
    %469 = vrot.lane.b32.xlu0 %v462, 112
    %v470 = vpop.permute.xlu0 %469
    %v472 = vmul.f32 %v461, %v470
    %474 = vrot.lane.b32.xlu0 %v472, 8
    %v475 = vpop.permute.xlu0 %474
    %v477 = vadd.f32 %v467, %v475
    %v478 = vtanh.pop %v477
    %480 = vrot.lane.b32.xlu0 %v478, 16
    %v481 = vpop.permute.xlu0 %480
    %v483 = vmul.f32 %v461, %v481
    %485 = vrot.lane.b32.xlu0 %v452, 104
    %v486 = vpop.permute.xlu0 %485
    %489 = vrot.lane.b32.xlu0 %v483, 80
    %v490 = vpop.permute.xlu0 %489
    %v492 = vsel %vm368, %v486, %v490
    %v493 = vpack.c.bf16 %v492, %v492
    %v495 = vsel %vm99, %v493, 0
    %497 = vmatprep.subr.bf16.mxu0 0
    %498 = vmatpush1.bf16.msra.mxu0 %v375
    %499 = vmatprep.subr.bf16.mxu0 0
    %500 = vmatpush1.bf16.msra.mxu0 0
    %501 = vmatprep.subr.bf16.mxu0 0
    %502 = vmatpush1.bf16.msra.mxu0 0
    %503 = vmatprep.subr.bf16.mxu0 0
    %504 = vmatpush1.bf16.msra.mxu0 0
    %505 = vmatprep.subr.bf16.mxu0 0
    %506 = vmatpush1.bf16.msra.mxu0 0
    %507 = vmatprep.subr.bf16.mxu0 0
    %508 = vmatpush1.bf16.msra.mxu0 0
    %509 = vmatprep.subr.bf16.mxu0 0
    %510 = vmatpush1.bf16.msra.mxu0 0
    %511 = vmatprep.subr.bf16.mxu0 0
    %512 = vmatpush1.bf16.msra.mxu0 0
    %513 = vmatprep.subr.bf16.mxu0 0
    %514 = vmatpush1.bf16.msra.mxu0 0
    %515 = vmatprep.subr.bf16.mxu0 0
    %516 = vmatpush1.bf16.msra.mxu0 0
    %517 = vmatprep.subr.bf16.mxu0 0
    %518 = vmatpush1.bf16.msra.mxu0 0
    %519 = vmatprep.subr.bf16.mxu0 0
    %520 = vmatpush1.bf16.msra.mxu0 0
    %521 = vmatprep.subr.bf16.mxu0 0
    %522 = vmatpush1.bf16.msra.mxu0 0
    %523 = vmatprep.subr.bf16.mxu0 0
    %524 = vmatpush1.bf16.msra.mxu0 0
    %525 = vmatprep.subr.bf16.mxu0 0
    %526 = vmatpush1.bf16.msra.mxu0 0
    %527 = vmatprep.subr.bf16.mxu0 0
    %528 = vmatpush1.bf16.msra.mxu0 0
    %529 = vmatprep.mubr.bf16.mxu0 0
    %530 = vmatmul.mubr.bf16.gmra.mrb[0].mxu0 %v495
    %v531 = vpop.f32.mrb[0].mxu0
    %v532 = vadd.f32 0.0, %v531
    %v533 = vpop.f32.mrb[0].mxu0
    %v534 = vpop.f32.mrb[0].mxu0
    %v535 = vpop.f32.mrb[0].mxu0
    %536 = vdwg.mxu0
    %v537 = vrot.slane %v300, 2
    %v538 = vrot.slane %v303, 1
    %v539 = vsel %vm357, %v538, %v537
    %v541 = vadd.f32 %v532, %v539
    %v542 = vmul.f32 %v541, 0.5
    %v543 = vtanh.pop %v542
    %v544 = vmul.f32 %v543, 0.5
    %v545 = vadd.f32 %v544, 0.5
    %v546 = vtanh.pop %v541
    %v547 = vmul.f32 %v545, %v446
    %549 = vrot.lane.b32.xlu0 %v546, 112
    %v550 = vpop.permute.xlu0 %549
    %v552 = vmul.f32 %v545, %v550
    %554 = vrot.lane.b32.xlu0 %v552, 8
    %v555 = vpop.permute.xlu0 %554
    %v557 = vadd.f32 %v547, %v555
    %v558 = vtanh.pop %v557
    %560 = vrot.lane.b32.xlu0 %v558, 16
    %v561 = vpop.permute.xlu0 %560
    %v563 = vmul.f32 %v545, %v561
    %v564 = vrot.slane %v300, 5
    %v565 = vrot.slane %v303, 4
    %v566 = vsel %vm357, %v565, %v564
    %v568 = vadd.f32 %v532, %v566
    %v569 = vmul.f32 %v568, 0.5
    %v570 = vtanh.pop %v569
    %v571 = vmul.f32 %v570, 0.5
    %v572 = vadd.f32 %v571, 0.5
    %v573 = vtanh.pop %v568
    %v574 = vmul.f32 %v572, %v477
    %576 = vrot.lane.b32.xlu0 %v573, 112
    %v577 = vpop.permute.xlu0 %576
    %v579 = vmul.f32 %v572, %v577
    %581 = vrot.lane.b32.xlu0 %v579, 8
    %v582 = vpop.permute.xlu0 %581
    %v584 = vadd.f32 %v574, %v582
    %v585 = vtanh.pop %v584
    %587 = vrot.lane.b32.xlu0 %v585, 16
    %v588 = vpop.permute.xlu0 %587
    %v590 = vmul.f32 %v572, %v588
    %592 = vrot.lane.b32.xlu0 %v563, 104
    %v593 = vpop.permute.xlu0 %592
    %596 = vrot.lane.b32.xlu0 %v590, 80
    %v597 = vpop.permute.xlu0 %596
    %v599 = vsel %vm368, %v593, %v597
    %v600 = vpack.c.bf16 %v599, %v599
    %v602 = vsel %vm99, %v600, 0
    %604 = vmatprep.subr.bf16.mxu0 0
    %605 = vmatpush1.bf16.msra.mxu0 %v375
    %606 = vmatprep.subr.bf16.mxu0 0
    %607 = vmatpush1.bf16.msra.mxu0 0
    %608 = vmatprep.subr.bf16.mxu0 0
    %609 = vmatpush1.bf16.msra.mxu0 0
    %610 = vmatprep.subr.bf16.mxu0 0
    %611 = vmatpush1.bf16.msra.mxu0 0
    %612 = vmatprep.subr.bf16.mxu0 0
    %613 = vmatpush1.bf16.msra.mxu0 0
    %614 = vmatprep.subr.bf16.mxu0 0
    %615 = vmatpush1.bf16.msra.mxu0 0
    %616 = vmatprep.subr.bf16.mxu0 0
    %617 = vmatpush1.bf16.msra.mxu0 0
    %618 = vmatprep.subr.bf16.mxu0 0
    %619 = vmatpush1.bf16.msra.mxu0 0
    %620 = vmatprep.subr.bf16.mxu0 0
    %621 = vmatpush1.bf16.msra.mxu0 0
    %622 = vmatprep.subr.bf16.mxu0 0
    %623 = vmatpush1.bf16.msra.mxu0 0
    %624 = vmatprep.subr.bf16.mxu0 0
    %625 = vmatpush1.bf16.msra.mxu0 0
    %626 = vmatprep.subr.bf16.mxu0 0
    %627 = vmatpush1.bf16.msra.mxu0 0
    %628 = vmatprep.subr.bf16.mxu0 0
    %629 = vmatpush1.bf16.msra.mxu0 0
    %630 = vmatprep.subr.bf16.mxu0 0
    %631 = vmatpush1.bf16.msra.mxu0 0
    %632 = vmatprep.subr.bf16.mxu0 0
    %633 = vmatpush1.bf16.msra.mxu0 0
    %634 = vmatprep.subr.bf16.mxu0 0
    %635 = vmatpush1.bf16.msra.mxu0 0
    %636 = vmatprep.mubr.bf16.mxu0 0
    %637 = vmatmul.mubr.bf16.gmra.mrb[0].mxu0 %v602
    %v638 = vpop.f32.mrb[0].mxu0
    %v639 = vadd.f32 0.0, %v638
    %v640 = vpop.f32.mrb[0].mxu0
    %v641 = vpop.f32.mrb[0].mxu0
    %v642 = vpop.f32.mrb[0].mxu0
    %643 = vdwg.mxu0
    %v644 = vrot.slane %v300, 3
    %v645 = vrot.slane %v303, 2
    %v646 = vsel %vm357, %v645, %v644
    %v648 = vadd.f32 %v639, %v646
    %v649 = vmul.f32 %v648, 0.5
    %v650 = vtanh.pop %v649
    %v651 = vmul.f32 %v650, 0.5
    %v652 = vadd.f32 %v651, 0.5
    %v653 = vtanh.pop %v648
    %v654 = vmul.f32 %v652, %v557
    %656 = vrot.lane.b32.xlu0 %v653, 112
    %v657 = vpop.permute.xlu0 %656
    %v659 = vmul.f32 %v652, %v657
    %661 = vrot.lane.b32.xlu0 %v659, 8
    %v662 = vpop.permute.xlu0 %661
    %v664 = vadd.f32 %v654, %v662
    %v665 = vtanh.pop %v664
    %667 = vrot.lane.b32.xlu0 %v665, 16
    %v668 = vpop.permute.xlu0 %667
    %v670 = vmul.f32 %v652, %v668
    %v671 = vrot.slane %v300, 4
    %v672 = vrot.slane %v303, 3
    %v673 = vsel %vm357, %v672, %v671
    %v675 = vadd.f32 %v639, %v673
    %v676 = vmul.f32 %v675, 0.5
    %v677 = vtanh.pop %v676
    %v678 = vmul.f32 %v677, 0.5
    %v679 = vadd.f32 %v678, 0.5
    %v680 = vtanh.pop %v675
    %v681 = vmul.f32 %v679, %v584
    %683 = vrot.lane.b32.xlu0 %v680, 112
    %v684 = vpop.permute.xlu0 %683
    %v686 = vmul.f32 %v679, %v684
    %688 = vrot.lane.b32.xlu0 %v686, 8
    %v689 = vpop.permute.xlu0 %688
    %v691 = vadd.f32 %v681, %v689
    %v692 = vtanh.pop %v691
    %694 = vrot.lane.b32.xlu0 %v692, 16
    %v695 = vpop.permute.xlu0 %694
    %v697 = vmul.f32 %v679, %v695
    %699 = vrot.lane.b32.xlu0 %v670, 104
    %v700 = vpop.permute.xlu0 %699
    %703 = vrot.lane.b32.xlu0 %v697, 80
    %v704 = vpop.permute.xlu0 %703
    %v706 = vsel %vm368, %v700, %v704
    %v707 = vpack.c.bf16 %v706, %v706
    %v709 = vsel %vm99, %v707, 0
    %711 = vmatprep.subr.bf16.mxu0 0
    %712 = vmatpush1.bf16.msra.mxu0 %v375
    %713 = vmatprep.subr.bf16.mxu0 0
    %714 = vmatpush1.bf16.msra.mxu0 0
    %715 = vmatprep.subr.bf16.mxu0 0
    %716 = vmatpush1.bf16.msra.mxu0 0
    %717 = vmatprep.subr.bf16.mxu0 0
    %718 = vmatpush1.bf16.msra.mxu0 0
    %719 = vmatprep.subr.bf16.mxu0 0
    %720 = vmatpush1.bf16.msra.mxu0 0
    %721 = vmatprep.subr.bf16.mxu0 0
    %722 = vmatpush1.bf16.msra.mxu0 0
    %723 = vmatprep.subr.bf16.mxu0 0
    %724 = vmatpush1.bf16.msra.mxu0 0
    %725 = vmatprep.subr.bf16.mxu0 0
    %726 = vmatpush1.bf16.msra.mxu0 0
    %727 = vmatprep.subr.bf16.mxu0 0
    %728 = vmatpush1.bf16.msra.mxu0 0
    %729 = vmatprep.subr.bf16.mxu0 0
    %730 = vmatpush1.bf16.msra.mxu0 0
    %731 = vmatprep.subr.bf16.mxu0 0
    %732 = vmatpush1.bf16.msra.mxu0 0
    %733 = vmatprep.subr.bf16.mxu0 0
    %734 = vmatpush1.bf16.msra.mxu0 0
    %735 = vmatprep.subr.bf16.mxu0 0
    %736 = vmatpush1.bf16.msra.mxu0 0
    %737 = vmatprep.subr.bf16.mxu0 0
    %738 = vmatpush1.bf16.msra.mxu0 0
    %739 = vmatprep.subr.bf16.mxu0 0
    %740 = vmatpush1.bf16.msra.mxu0 0
    %741 = vmatprep.subr.bf16.mxu0 0
    %742 = vmatpush1.bf16.msra.mxu0 0
    %743 = vmatprep.mubr.bf16.mxu0 0
    %744 = vmatmul.mubr.bf16.gmra.mrb[0].mxu0 %v709
    %v745 = vpop.f32.mrb[0].mxu0
    %v746 = vadd.f32 0.0, %v745
    %v747 = vpop.f32.mrb[0].mxu0
    %v748 = vpop.f32.mrb[0].mxu0
    %v749 = vpop.f32.mrb[0].mxu0
    %750 = vdwg.mxu0
    %v751 = vadd.f32 %v746, %v673
    %v752 = vmul.f32 %v751, 0.5
    %v753 = vtanh.pop %v752
    %v754 = vmul.f32 %v753, 0.5
    %v755 = vadd.f32 %v754, 0.5
    %v756 = vtanh.pop %v751
    %v757 = vmul.f32 %v755, %v664
    %759 = vrot.lane.b32.xlu0 %v756, 112
    %v760 = vpop.permute.xlu0 %759
    %v762 = vmul.f32 %v755, %v760
    %764 = vrot.lane.b32.xlu0 %v762, 8
    %v765 = vpop.permute.xlu0 %764
    %v767 = vadd.f32 %v757, %v765
    %v768 = vtanh.pop %v767
    %770 = vrot.lane.b32.xlu0 %v768, 16
    %v771 = vpop.permute.xlu0 %770
    %v773 = vmul.f32 %v755, %v771
    %v774 = vadd.f32 %v746, %v646
    %v775 = vmul.f32 %v774, 0.5
    %v776 = vtanh.pop %v775
    %v777 = vmul.f32 %v776, 0.5
    %v778 = vadd.f32 %v777, 0.5
    %v779 = vtanh.pop %v774
    %v780 = vmul.f32 %v778, %v691
    %782 = vrot.lane.b32.xlu0 %v779, 112
    %v783 = vpop.permute.xlu0 %782
    %v785 = vmul.f32 %v778, %v783
    %787 = vrot.lane.b32.xlu0 %v785, 8
    %v788 = vpop.permute.xlu0 %787
    %v790 = vadd.f32 %v780, %v788
    %v791 = vtanh.pop %v790
    %793 = vrot.lane.b32.xlu0 %v791, 16
    %v794 = vpop.permute.xlu0 %793
    %v796 = vmul.f32 %v778, %v794
    %798 = vrot.lane.b32.xlu0 %v773, 104
    %v799 = vpop.permute.xlu0 %798
    %802 = vrot.lane.b32.xlu0 %v796, 80
    %v803 = vpop.permute.xlu0 %802
    %v805 = vsel %vm368, %v799, %v803
    %v806 = vpack.c.bf16 %v805, %v805
    %v808 = vsel %vm99, %v806, 0
    %810 = vmatprep.subr.bf16.mxu0 0
    %811 = vmatpush1.bf16.msra.mxu0 %v375
    %812 = vmatprep.subr.bf16.mxu0 0
    %813 = vmatpush1.bf16.msra.mxu0 0
    %814 = vmatprep.subr.bf16.mxu0 0
    %815 = vmatpush1.bf16.msra.mxu0 0
    %816 = vmatprep.subr.bf16.mxu0 0
    %817 = vmatpush1.bf16.msra.mxu0 0
    %818 = vmatprep.subr.bf16.mxu0 0
    %819 = vmatpush1.bf16.msra.mxu0 0
    %820 = vmatprep.subr.bf16.mxu0 0
    %821 = vmatpush1.bf16.msra.mxu0 0
    %822 = vmatprep.subr.bf16.mxu0 0
    %823 = vmatpush1.bf16.msra.mxu0 0
    %824 = vmatprep.subr.bf16.mxu0 0
    %825 = vmatpush1.bf16.msra.mxu0 0
    %826 = vmatprep.subr.bf16.mxu0 0
    %827 = vmatpush1.bf16.msra.mxu0 0
    %828 = vmatprep.subr.bf16.mxu0 0
    %829 = vmatpush1.bf16.msra.mxu0 0
    %830 = vmatprep.subr.bf16.mxu0 0
    %831 = vmatpush1.bf16.msra.mxu0 0
    %832 = vmatprep.subr.bf16.mxu0 0
    %833 = vmatpush1.bf16.msra.mxu0 0
    %834 = vmatprep.subr.bf16.mxu0 0
    %835 = vmatpush1.bf16.msra.mxu0 0
    %836 = vmatprep.subr.bf16.mxu0 0
    %837 = vmatpush1.bf16.msra.mxu0 0
    %838 = vmatprep.subr.bf16.mxu0 0
    %839 = vmatpush1.bf16.msra.mxu0 0
    %840 = vmatprep.subr.bf16.mxu0 0
    %841 = vmatpush1.bf16.msra.mxu0 0
    %842 = vmatprep.mubr.bf16.mxu0 0
    %843 = vmatmul.mubr.bf16.gmra.mrb[0].mxu0 %v808
    %v844 = vpop.f32.mrb[0].mxu0
    %v845 = vadd.f32 0.0, %v844
    %v846 = vpop.f32.mrb[0].mxu0
    %v847 = vpop.f32.mrb[0].mxu0
    %v848 = vpop.f32.mrb[0].mxu0
    %849 = vdwg.mxu0
    %v850 = vadd.f32 %v845, %v566
    %v851 = vmul.f32 %v850, 0.5
    %v852 = vtanh.pop %v851
    %v853 = vmul.f32 %v852, 0.5
    %v854 = vadd.f32 %v853, 0.5
    %v855 = vtanh.pop %v850
    %v856 = vmul.f32 %v854, %v767
    %858 = vrot.lane.b32.xlu0 %v855, 112
    %v859 = vpop.permute.xlu0 %858
    %v861 = vmul.f32 %v854, %v859
    %863 = vrot.lane.b32.xlu0 %v861, 8
    %v864 = vpop.permute.xlu0 %863
    %v866 = vadd.f32 %v856, %v864
    %v867 = vtanh.pop %v866
    %869 = vrot.lane.b32.xlu0 %v867, 16
    %v870 = vpop.permute.xlu0 %869
    %v872 = vmul.f32 %v854, %v870
    %v873 = vadd.f32 %v845, %v539
    %v874 = vmul.f32 %v873, 0.5
    %v875 = vtanh.pop %v874
    %v876 = vmul.f32 %v875, 0.5
    %v877 = vadd.f32 %v876, 0.5
    %v878 = vtanh.pop %v873
    %v879 = vmul.f32 %v877, %v790
    %881 = vrot.lane.b32.xlu0 %v878, 112
    %v882 = vpop.permute.xlu0 %881
    %v884 = vmul.f32 %v877, %v882
    %886 = vrot.lane.b32.xlu0 %v884, 8
    %v887 = vpop.permute.xlu0 %886
    %v889 = vadd.f32 %v879, %v887
    %v890 = vtanh.pop %v889
    %892 = vrot.lane.b32.xlu0 %v890, 16
    %v893 = vpop.permute.xlu0 %892
    %v895 = vmul.f32 %v877, %v893
    %897 = vrot.lane.b32.xlu0 %v872, 104
    %v898 = vpop.permute.xlu0 %897
    %901 = vrot.lane.b32.xlu0 %v895, 80
    %v902 = vpop.permute.xlu0 %901
    %v904 = vsel %vm368, %v898, %v902
    %v905 = vpack.c.bf16 %v904, %v904
    %v907 = vsel %vm99, %v905, 0
    %909 = vmatprep.subr.bf16.mxu0 0
    %910 = vmatpush1.bf16.msra.mxu0 %v375
    %911 = vmatprep.subr.bf16.mxu0 0
    %912 = vmatpush1.bf16.msra.mxu0 0
    %913 = vmatprep.subr.bf16.mxu0 0
    %914 = vmatpush1.bf16.msra.mxu0 0
    %915 = vmatprep.subr.bf16.mxu0 0
    %916 = vmatpush1.bf16.msra.mxu0 0
    %917 = vmatprep.subr.bf16.mxu0 0
    %918 = vmatpush1.bf16.msra.mxu0 0
    %919 = vmatprep.subr.bf16.mxu0 0
    %920 = vmatpush1.bf16.msra.mxu0 0
    %921 = vmatprep.subr.bf16.mxu0 0
    %922 = vmatpush1.bf16.msra.mxu0 0
    %923 = vmatprep.subr.bf16.mxu0 0
    %924 = vmatpush1.bf16.msra.mxu0 0
    %925 = vmatprep.subr.bf16.mxu0 0
    %926 = vmatpush1.bf16.msra.mxu0 0
    %927 = vmatprep.subr.bf16.mxu0 0
    %928 = vmatpush1.bf16.msra.mxu0 0
    %929 = vmatprep.subr.bf16.mxu0 0
    %930 = vmatpush1.bf16.msra.mxu0 0
    %931 = vmatprep.subr.bf16.mxu0 0
    %932 = vmatpush1.bf16.msra.mxu0 0
    %933 = vmatprep.subr.bf16.mxu0 0
    %934 = vmatpush1.bf16.msra.mxu0 0
    %935 = vmatprep.subr.bf16.mxu0 0
    %936 = vmatpush1.bf16.msra.mxu0 0
    %937 = vmatprep.subr.bf16.mxu0 0
    %938 = vmatpush1.bf16.msra.mxu0 0
    %939 = vmatprep.subr.bf16.mxu0 0
    %940 = vmatpush1.bf16.msra.mxu0 0
    %941 = vmatprep.mubr.bf16.mxu0 0
    %942 = vmatmul.mubr.bf16.gmra.mrb[0].mxu0 %v907
    %v943 = vpop.f32.mrb[0].mxu0
    %v944 = vadd.f32 0.0, %v943
    %v945 = vpop.f32.mrb[0].mxu0
    %v946 = vpop.f32.mrb[0].mxu0
    %v947 = vpop.f32.mrb[0].mxu0
    %948 = vdwg.mxu0
    %v949 = vadd.f32 %v944, %v455
    %v950 = vmul.f32 %v949, 0.5
    %v951 = vtanh.pop %v950
    %v952 = vmul.f32 %v951, 0.5
    %v953 = vadd.f32 %v952, 0.5
    %v954 = vtanh.pop %v949
    %v955 = vmul.f32 %v953, %v866
    %957 = vrot.lane.b32.xlu0 %v954, 112
    %v958 = vpop.permute.xlu0 %957
    %v960 = vmul.f32 %v953, %v958
    %962 = vrot.lane.b32.xlu0 %v960, 8
    %v963 = vpop.permute.xlu0 %962
    %v965 = vadd.f32 %v955, %v963
    %v966 = vtanh.pop %v965
    %968 = vrot.lane.b32.xlu0 %v966, 16
    %v969 = vpop.permute.xlu0 %968
    %v971 = vmul.f32 %v953, %v969
    %v972 = vadd.f32 %v944, %v423
    %v973 = vmul.f32 %v972, 0.5
    %v974 = vtanh.pop %v973
    %v975 = vmul.f32 %v974, 0.5
    %v976 = vadd.f32 %v975, 0.5
    %v977 = vtanh.pop %v972
    %v978 = vmul.f32 %v976, %v889
    %980 = vrot.lane.b32.xlu0 %v977, 112
    %v981 = vpop.permute.xlu0 %980
    %v983 = vmul.f32 %v976, %v981
    %985 = vrot.lane.b32.xlu0 %v983, 8
    %v986 = vpop.permute.xlu0 %985
    %v988 = vadd.f32 %v978, %v986
    %v989 = vtanh.pop %v988
    %991 = vrot.lane.b32.xlu0 %v989, 16
    %v992 = vpop.permute.xlu0 %991
    %v994 = vmul.f32 %v976, %v992
    %996 = vrot.lane.b32.xlu0 %v971, 104
    %v997 = vpop.permute.xlu0 %996
    %1000 = vrot.lane.b32.xlu0 %v994, 80
    %v1001 = vpop.permute.xlu0 %1000
    %v1003 = vsel %vm368, %v997, %v1001
    %v1004 = vpack.c.bf16 %v1003, %v1003
    %v1006 = vsel %vm99, %v1004, 0
    %1008 = vmatprep.subr.bf16.mxu0 0
    %1009 = vmatpush1.bf16.msra.mxu0 %v375
    %1010 = vmatprep.subr.bf16.mxu0 0
    %1011 = vmatpush1.bf16.msra.mxu0 0
    %1012 = vmatprep.subr.bf16.mxu0 0
    %1013 = vmatpush1.bf16.msra.mxu0 0
    %1014 = vmatprep.subr.bf16.mxu0 0
    %1015 = vmatpush1.bf16.msra.mxu0 0
    %1016 = vmatprep.subr.bf16.mxu0 0
    %1017 = vmatpush1.bf16.msra.mxu0 0
    %1018 = vmatprep.subr.bf16.mxu0 0
    %1019 = vmatpush1.bf16.msra.mxu0 0
    %1020 = vmatprep.subr.bf16.mxu0 0
    %1021 = vmatpush1.bf16.msra.mxu0 0
    %1022 = vmatprep.subr.bf16.mxu0 0
    %1023 = vmatpush1.bf16.msra.mxu0 0
    %1024 = vmatprep.subr.bf16.mxu0 0
    %1025 = vmatpush1.bf16.msra.mxu0 0
    %1026 = vmatprep.subr.bf16.mxu0 0
    %1027 = vmatpush1.bf16.msra.mxu0 0
    %1028 = vmatprep.subr.bf16.mxu0 0
    %1029 = vmatpush1.bf16.msra.mxu0 0
    %1030 = vmatprep.subr.bf16.mxu0 0
    %1031 = vmatpush1.bf16.msra.mxu0 0
    %1032 = vmatprep.subr.bf16.mxu0 0
    %1033 = vmatpush1.bf16.msra.mxu0 0
    %1034 = vmatprep.subr.bf16.mxu0 0
    %1035 = vmatpush1.bf16.msra.mxu0 0
    %1036 = vmatprep.subr.bf16.mxu0 0
    %1037 = vmatpush1.bf16.msra.mxu0 0
    %1038 = vmatprep.subr.bf16.mxu0 0
    %1039 = vmatpush1.bf16.msra.mxu0 0
    %1040 = vmatprep.mubr.bf16.mxu0 0
    %1041 = vmatmul.mubr.bf16.gmra.mrb[0].mxu0 %v1006
    %v1042 = vpop.f32.mrb[0].mxu0
    %v1043 = vadd.f32 0.0, %v1042
    %v1044 = vpop.f32.mrb[0].mxu0
    %v1045 = vpop.f32.mrb[0].mxu0
    %v1046 = vpop.f32.mrb[0].mxu0
    %1047 = vdwg.mxu0
    %v1048 = vrot.slane %v300, 7
    %v1049 = vrot.slane %v303, 6
    %v1050 = vsel %vm357, %v1049, %v1048
    %v1052 = vadd.f32 %v1043, %v1050
    %v1053 = vmul.f32 %v1052, 0.5
    %v1054 = vtanh.pop %v1053
    %v1055 = vmul.f32 %v1054, 0.5
    %v1056 = vadd.f32 %v1055, 0.5
    %v1057 = vtanh.pop %v1052
    %v1058 = vmul.f32 %v1056, %v965
    %1060 = vrot.lane.b32.xlu0 %v1057, 112
    %v1061 = vpop.permute.xlu0 %1060
    %v1063 = vmul.f32 %v1056, %v1061
    %1065 = vrot.lane.b32.xlu0 %v1063, 8
    %v1066 = vpop.permute.xlu0 %1065
    %v1068 = vadd.f32 %v1058, %v1066
    %v1069 = vtanh.pop %v1068
    %1071 = vrot.lane.b32.xlu0 %v1069, 16
    %v1072 = vpop.permute.xlu0 %1071
    %v1074 = vmul.f32 %v1056, %v1072
    %v1075 = vrot.slane %v303, 7
    %v1076 = vsel %vm357, %v1075, %v300
    %v1078 = vadd.f32 %v1043, %v1076
    %v1079 = vmul.f32 %v1078, 0.5
    %v1080 = vtanh.pop %v1079
    %v1081 = vmul.f32 %v1080, 0.5
    %v1082 = vadd.f32 %v1081, 0.5
    %v1083 = vtanh.pop %v1078
    %v1084 = vmul.f32 %v1082, %v988
    %1086 = vrot.lane.b32.xlu0 %v1083, 112
    %v1087 = vpop.permute.xlu0 %1086
    %v1089 = vmul.f32 %v1082, %v1087
    %1091 = vrot.lane.b32.xlu0 %v1089, 8
    %v1092 = vpop.permute.xlu0 %1091
    %v1094 = vadd.f32 %v1084, %v1092
    %v1095 = vtanh.pop %v1094
    %1097 = vrot.lane.b32.xlu0 %v1095, 16
    %v1098 = vpop.permute.xlu0 %1097
    %v1100 = vmul.f32 %v1082, %v1098
    %v1102 = vrot.slane %v452, 6
    %v1104 = vrot.slane %v563, 4
    %v1106 = vrot.slane %v670, 2
    %v1108 = vrot.slane %v872, 6
    %v1110 = vrot.slane %v971, 4
    %v1113 = vrot.slane %v1074, 2
    %vm1115 = vcmask 1041408
    %v1116 = vsel %vm1115, %v358, %v1102
    %vm1117 = vcmask 1043456
    %v1118 = vsel %vm1117, %v1116, %v1104
    %vm1119 = vcmask 1045504
    %v1120 = vsel %vm1119, %v1118, %v1106
    %v1121 = vsel %vm1115, %v773, %v1108
    %v1122 = vsel %vm1117, %v1121, %v1110
    %v1123 = vsel %vm1119, %v1122, %v1113
    %v1124 = vrot.slane %v994, 6
    %v1126 = vrot.slane %v895, 4
    %v1128 = vrot.slane %v796, 2
    %v1130 = vrot.slane %v590, 6
    %v1132 = vrot.slane %v483, 4
    %v1134 = vrot.slane %v352, 1
    %vm1135 = vcmask 1047559
    %v1136 = vsel %vm1135, %v353, %v1134
    %v1138 = vsel %vm1115, %v1100, %v1124
    %v1139 = vsel %vm1117, %v1138, %v1126
    %v1140 = vsel %vm1119, %v1139, %v1128
    %v1141 = vsel %vm1115, %v697, %v1130
    %v1142 = vsel %vm1117, %v1141, %v1132
    %v1143 = vsel %vm1119, %v1142, %v1136
    %1146 = vrot.lane.b32.xlu0 %v1120, 104
    %v1147 = vpop.permute.xlu0 %1146
    %1148 = vrot.lane.b32.xlu0 %v1123, 104
    %v1149 = vpop.permute.xlu0 %1148
    %1154 = vrot.lane.b32.xlu0 %v1140, 80
    %v1155 = vpop.permute.xlu0 %1154
    %1156 = vrot.lane.b32.xlu0 %v1143, 80
    %v1157 = vpop.permute.xlu0 %1156
    %v1160 = vsel %vm368, %v1147, %v1155
    %v1161 = vsel %vm368, %v1149, %v1157
    %v1162 = vtanh.pop %v1160
    %v1163 = vtanh.pop %v1161
    %v1164 = vpack.c.bf16 %v1163, %v1162
    %v1165 = vld [vmem:[%s6] sm:$0xf]
    %v1166 = vld [vmem:[%s6 + $0x4] sm:$0xf]
    %v1167 = vld [vmem:[%s7] sm:$0x1]
    %v1169 = vlaneseq
    %v1170 = vshrl.u32 %v1169, 7
    %v1171 = vsub.s32 0, %v1170
    %v1172 = vrot.slane %v1167, %v1171
    %v1176 = vunpack.c.l.b16 %v1165
    %v1177 = vunpack.c.l.b16 %v1166
    %v1178 = vpack.c.b16 %v1177, %v1176
    %v1181 = vsel %vm99, %v1164, 0
    %1183 = vmatprep.subr.bf16.mxu0 0
    %1184 = vmatpush1.bf16.msra.mxu0 %v1178
    %1185 = vmatprep.subr.bf16.mxu0 0
    %1186 = vmatpush1.bf16.msra.mxu0 0
    %1187 = vmatprep.subr.bf16.mxu0 0
    %1188 = vmatpush1.bf16.msra.mxu0 0
    %1189 = vmatprep.subr.bf16.mxu0 0
    %1190 = vmatpush1.bf16.msra.mxu0 0
    %1191 = vmatprep.subr.bf16.mxu0 0
    %1192 = vmatpush1.bf16.msra.mxu0 0
    %1193 = vmatprep.subr.bf16.mxu0 0
    %1194 = vmatpush1.bf16.msra.mxu0 0
    %1195 = vmatprep.subr.bf16.mxu0 0
    %1196 = vmatpush1.bf16.msra.mxu0 0
    %1197 = vmatprep.subr.bf16.mxu0 0
    %1198 = vmatpush1.bf16.msra.mxu0 0
    %1199 = vmatprep.subr.bf16.mxu0 0
    %1200 = vmatpush1.bf16.msra.mxu0 0
    %1201 = vmatprep.subr.bf16.mxu0 0
    %1202 = vmatpush1.bf16.msra.mxu0 0
    %1203 = vmatprep.subr.bf16.mxu0 0
    %1204 = vmatpush1.bf16.msra.mxu0 0
    %1205 = vmatprep.subr.bf16.mxu0 0
    %1206 = vmatpush1.bf16.msra.mxu0 0
    %1207 = vmatprep.subr.bf16.mxu0 0
    %1208 = vmatpush1.bf16.msra.mxu0 0
    %1209 = vmatprep.subr.bf16.mxu0 0
    %1210 = vmatpush1.bf16.msra.mxu0 0
    %1211 = vmatprep.subr.bf16.mxu0 0
    %1212 = vmatpush1.bf16.msra.mxu0 0
    %1213 = vmatprep.subr.bf16.mxu0 0
    %1214 = vmatpush1.bf16.msra.mxu0 0
    %1215 = vmatprep.mubr.bf16.mxu0 0
    %1216 = vmatmul.mubr.bf16.gmra.mrb[0].mxu0 %v1181
    %v1217 = vpop.f32.mrb[0].mxu0
    %v1218 = vadd.f32 %v1172, %v1217
    %v1219 = vpop.f32.mrb[0].mxu0
    %v1220 = vpop.f32.mrb[0].mxu0
    %v1221 = vadd.f32 %v1172, %v1220
    %v1222 = vpop.f32.mrb[0].mxu0
    %1223 = vdwg.mxu0
    %v1224 = vmul.f32 %v1218, 0.5
    %v1225 = vmul.f32 %v1221, 0.5
    %v1226 = vtanh.pop %v1224
    %v1227 = vtanh.pop %v1225
    %v1228 = vmul.f32 %v1226, 0.5
    %v1229 = vmul.f32 %v1227, 0.5
    %v1230 = vadd.f32 %v1228, 0.5
    %v1231 = vadd.f32 %v1229, 0.5
    %v1232 = vmul.f32 %v1162, %v1230
    %v1233 = vmul.f32 %v1163, %v1231
    %v1234 = vsel %vm99, %v1232, 0.0
    %1235 = vadd.xlane.f32.xlu0 %v1234
    %v1236 = vpop.xlane.xlu0 %1235
    %v1237 = vsel %vm99, %v1233, 0.0
    %1238 = vadd.xlane.f32.xlu0 %v1237
    %v1239 = vpop.xlane.xlu0 %1238
    %v1240 = vmul.f32 %v1236, 0.0625
    %v1241 = vmul.f32 %v1239, 0.0625
    %v1242 = vld [vmem:[%s8] sm:$0xff]
    %v1243 = vld [vmem:[%s8 + $0x8] sm:$0xff]
    %v1244 = vunpack.c.l.bf16 %v1242
    %v1245 = vunpack.c.h.bf16 %v1242
    %v1246 = vunpack.c.l.bf16 %v1243
    %v1247 = vunpack.c.h.bf16 %v1243
    %v1248 = vmul.f32 %v1240, %v1244
    %v1249 = vmul.f32 %v1240, %v1245
    %v1250 = vmul.f32 %v1241, %v1246
    %v1251 = vmul.f32 %v1241, %v1247
    %v1252 = vpack.c.bf16 %v1250, %v1248
    %v1253 = vpack.c.bf16 %v1251, %v1249
    %v1254 = vld [vmem:[%s10] sm:$0x1]
    %v1255 = vld [vmem:[%s9] sm:$0x3]
    %v1257 = vlaneseq
    %v1258 = vshrl.u32 %v1257, 7
    %v1259 = vsub.s32 0, %v1258
    %v1260 = vrot.slane %v1255, %v1259
    %v1261 = vlaneseq
    %v1262 = vshrl.u32 %v1261, 7
    %v1263 = vsub.s32 1, %v1262
    %v1264 = vrot.slane %v1255, %v1263
    %v1268 = vsel %vm99, %v1254, 0
    %1270 = vmatprep.subr.bf16.mxu0 %v1253
    %1271 = vmatpush1.bf16.msra.mxu0 %v1252
    %1272 = vmatprep.subr.bf16.mxu0 0
    %1273 = vmatpush1.bf16.msra.mxu0 0
    %1274 = vmatprep.subr.bf16.mxu0 0
    %1275 = vmatpush1.bf16.msra.mxu0 0
    %1276 = vmatprep.subr.bf16.mxu0 0
    %1277 = vmatpush1.bf16.msra.mxu0 0
    %1278 = vmatprep.subr.bf16.mxu0 0
    %1279 = vmatpush1.bf16.msra.mxu0 0
    %1280 = vmatprep.subr.bf16.mxu0 0
    %1281 = vmatpush1.bf16.msra.mxu0 0
    %1282 = vmatprep.subr.bf16.mxu0 0
    %1283 = vmatpush1.bf16.msra.mxu0 0
    %1284 = vmatprep.subr.bf16.mxu0 0
    %1285 = vmatpush1.bf16.msra.mxu0 0
    %1286 = vmatprep.subr.bf16.mxu0 0
    %1287 = vmatpush1.bf16.msra.mxu0 0
    %1288 = vmatprep.subr.bf16.mxu0 0
    %1289 = vmatpush1.bf16.msra.mxu0 0
    %1290 = vmatprep.subr.bf16.mxu0 0
    %1291 = vmatpush1.bf16.msra.mxu0 0
    %1292 = vmatprep.subr.bf16.mxu0 0
    %1293 = vmatpush1.bf16.msra.mxu0 0
    %1294 = vmatprep.subr.bf16.mxu0 0
    %1295 = vmatpush1.bf16.msra.mxu0 0
    %1296 = vmatprep.subr.bf16.mxu0 0
    %1297 = vmatpush1.bf16.msra.mxu0 0
    %1298 = vmatprep.subr.bf16.mxu0 0
    %1299 = vmatpush1.bf16.msra.mxu0 0
    %1300 = vmatprep.subr.bf16.mxu0 0
    %1301 = vmatpush1.bf16.msra.mxu0 0
    %1302 = vmatprep.mubr.bf16.mxu0 0
    %1303 = vmatmul.mubr.bf16.gmra.mrb[0].mxu0 %v1268
    %v1304 = vpop.f32.mrb[0].mxu0
    %v1305 = vadd.f32 %v1260, %v1304
    %v1306 = vpop.f32.mrb[0].mxu0
    %v1307 = vadd.f32 %v1264, %v1306
    %v1308 = vpop.f32.mrb[0].mxu0
    %v1309 = vpop.f32.mrb[0].mxu0
    %1310 = vdwg.mxu0
    %v1311 = vmul.f32 %v1305, 0.5
    %v1312 = vmul.f32 %v1307, 0.5
    %v1313 = vtanh.pop %v1311
    %v1314 = vtanh.pop %v1312
    %v1315 = vmul.f32 %v1313, 0.5
    %v1316 = vmul.f32 %v1314, 0.5
    %v1317 = vadd.f32 %v1315, 0.5
    %v1318 = vadd.f32 %v1316, 0.5
    %v1321 = vcombine.low %v1317, %v1318
    %v1323 = vunpack.c.l.s4 1983009808
    %v1324 = vunpack.c.0.s8 %v1323
    %v1325 = vlaneseq
    %v1326 = vshrl.u32 %v1325, 7
    %v1327 = vsub.s32 %v1324, %v1326
    %v1328 = vrot.slane %v1321, %v1327
    %1330 = vst [vmem:[#allocation2] sm:$0xf] %v1328
    // Predicated region
    $region46: #{cnn_lstm_eca_forward.1} parent=1 // pred_check
      _
    $region47: #{cnn_lstm_eca_forward.1} parent=1 // pred_check_branch
      %1332 = sbr.rel (0) target = $region49
    $region48: #{cnn_lstm_eca_forward.1} parent=1 // pred_region
      %s1334 = ssub.s32 64, 64
      %1335 = vsyncadd [#allocation3], %s1334
      %s1337 = sshll.u32 [#allocation2], 4
      %s1338 = int_to_ptr.vmem [resolvable:$true] %s1337
      %1340 = dma.vmem_to_hbm [thread:$0]  %s1338, 64, %s11, [#allocation3]
    $region49: #{cnn_lstm_eca_forward.1} parent=1 // pred_fallthru
      _
    // Predicated region
    $region50: #{cnn_lstm_eca_forward.1} parent=1 // pred_check
      _
    $region51: #{cnn_lstm_eca_forward.1} parent=1 // pred_check_branch
      %1342 = sbr.rel (0) target = $region53
    $region52: #{cnn_lstm_eca_forward.1} parent=1 // pred_region
      %1343 = dma.done [#allocation3], 64
    $region53: #{cnn_lstm_eca_forward.1} parent=1 // pred_fallthru
      _
    %1344 = vsyncpa [#allocation3], 1

</llo_original>
